<compile_context>
chip_gen: v5e
topology: v5e:2x2
jax: 0.10.0
libtpu: 0.0.40
codegen_flags: <defaults>
</compile_context>

<pallas_src>
import functools

import jax
import jax.numpy as jnp
import numpy as np
from jax import lax
from jax.experimental import pallas as pl
from jax.experimental.pallas import tpu as pltpu

_VMEM_LIMIT = 32 * 1024 * 1024  # comfortably under v7x's 64 MiB physical VMEM


# ----------------------------------------------------------------------------
# Static per-layer constants (numpy, resolved at trace time)
# ----------------------------------------------------------------------------
def _conv_layer_constants(H, W, kh, kw):
    """Tap shifts, boundary masks and pool row-selection matrix for one layer."""
    assert kh % 2 == 1 and kw % 2 == 1, "same-padding conv assumes odd kernels"
    ph, pw = kh // 2, kw // 2
    HW = H * W
    Ho = H // 2
    hh = np.arange(HW) // W
    ww = np.arange(HW) % W
    shifts, masks = [], []
    for dh in range(kh):
        for dw in range(kw):
            shifts.append((dh - ph) * W + (dw - pw))
            hin = hh + dh - ph
            win = ww + dw - pw
            masks.append(((hin >= 0) & (hin < H) & (win >= 0) & (win < W))
                         .astype(np.float32))
    masks = np.stack(masks, axis=0)                       # (kh*kw, HW)
    pad_left = max(0, -min(shifts))
    pad_right = max(0, max(shifts))
    # MaxPool((2,1),(2,1)): pooled (j, w) <- flat position p = 2*j*W + w of the
    # adjacent-row max m[p] = max(conv[p], conv[p + W]).
    out_cols = Ho * W
    sel = np.zeros((HW - W, out_cols), np.float32)
    q = np.arange(out_cols)
    sel[2 * q - (q % W), q] = 1.0
    return tuple(shifts), masks, pad_left, pad_right, sel, out_cols


# ----------------------------------------------------------------------------
# Fused conv + bias + ReLU + MaxPool((2,1),(2,1)) kernel (one sample per step)
# ----------------------------------------------------------------------------
def _conv_relu_pool_kernel(x_ref, wt_ref, b_ref, mask_ref, sel_ref, o_ref, *,
                           shifts, pad_left, HW, W):
    """
    x_ref   : (1, Cin, HW + pads)   flat-padded input sample (f32)
    wt_ref  : (kh*kw, Cout, Cin)    per-tap weights (bf16)
    b_ref   : (Cout, 1)             bias (f32)
    mask_ref: (kh*kw, HW)           per-tap boundary validity masks (f32)
    sel_ref : (HW - W, Ho*W)        0/1 even-row selection matrix (f32)
    o_ref   : (1, Cout, Ho*W)       pooled output sample (f32)
    """
    x = x_ref[0]                                      # (Cin, HWp)
    masks = mask_ref[...]                             # (T, HW)
    cout = wt_ref.shape[1]
    acc = jnp.zeros((cout, HW), jnp.float32)
    for t, s in enumerate(shifts):                    # unrolled: kh*kw taps
        start = pad_left + s
        xs = x[:, start:start + HW] * masks[t:t + 1, :]
        acc = acc + jnp.dot(wt_ref[t], xs.astype(jnp.bfloat16),
                            preferred_element_type=jnp.float32)
    acc = jnp.maximum(acc + b_ref[...], 0.0)          # bias + ReLU
    m = jnp.maximum(acc[:, :HW - W], acc[:, W:])      # max over adjacent H rows
    o_ref[0] = jnp.dot(m, sel_ref[...],
                       preferred_element_type=jnp.float32).astype(o_ref.dtype)


def conv_relu_pool(xw, wt, bias, masks, sel, *, shifts, pad_left, HW, W, out_cols):
    N, Cin, HWp = xw.shape
    T, Cout, _ = wt.shape
    kern = functools.partial(_conv_relu_pool_kernel, shifts=shifts,
                             pad_left=pad_left, HW=HW, W=W)
    return pl.pallas_call(
        kern,
        out_shape=jax.ShapeDtypeStruct((N, Cout, out_cols), jnp.float32),
        grid=(N,),
        in_specs=[
            pl.BlockSpec((1, Cin, HWp), lambda n: (n, 0, 0)),
            pl.BlockSpec((T, Cout, Cin), lambda n: (0, 0, 0)),
            pl.BlockSpec((Cout, 1), lambda n: (0, 0)),
            pl.BlockSpec((T, HW), lambda n: (0, 0)),
            pl.BlockSpec((HW - W, out_cols), lambda n: (0, 0)),
        ],
        out_specs=pl.BlockSpec((1, Cout, out_cols), lambda n: (n, 0, 0)),
        compiler_params=pltpu.CompilerParams(
            dimension_semantics=("parallel",),
            vmem_limit_bytes=_VMEM_LIMIT,
        ),
    )(xw, wt, bias, masks, sel)


# ----------------------------------------------------------------------------
# Fused fc1 + ReLU + Dropout(eval) + fc2 kernel (M-tiled over the batch)
# ----------------------------------------------------------------------------
def _fc_head_kernel(x_ref, w1_ref, b1_ref, w2_ref, b2_ref, o_ref):
    x = x_ref[...].astype(jnp.bfloat16)
    h = jnp.dot(x, w1_ref[...], preferred_element_type=jnp.float32) + b1_ref[...]
    h = jnp.maximum(h, 0.0)
    # TODO(synk): training-mode stochastic dropout masking not implemented
    # (eval-mode identity, matching module.eval()).
    out = jnp.dot(h.astype(jnp.bfloat16), w2_ref[...],
                  preferred_element_type=jnp.float32) + b2_ref[...]
    o_ref[...] = out.astype(o_ref.dtype)


def fc_head(x, w1, b1, w2, b2):
    M, K = x.shape
    _, D = w1.shape
    _, C = w2.shape
    tm = min(128, M)                                  # tiles+pipelines when batch grows
    return pl.pallas_call(
        _fc_head_kernel,
        out_shape=jax.ShapeDtypeStruct((M, C), jnp.float32),
        grid=(pl.cdiv(M, tm),),
        in_specs=[
            pl.BlockSpec((tm, K), lambda i: (i, 0)),
            pl.BlockSpec((K, D), lambda i: (0, 0)),
            pl.BlockSpec((1, D), lambda i: (0, 0)),
            pl.BlockSpec((D, C), lambda i: (0, 0)),
            pl.BlockSpec((1, C), lambda i: (0, 0)),
        ],
        out_specs=pl.BlockSpec((tm, C), lambda i: (i, 0)),
        compiler_params=pltpu.CompilerParams(
            dimension_semantics=("parallel",),
            vmem_limit_bytes=_VMEM_LIMIT,
        ),
    )(x, w1, b1, w2, b2)


# ----------------------------------------------------------------------------
# Parameters + forward (matches the PyTorch CNN2D.forward semantics)
# ----------------------------------------------------------------------------
def init_cnn2d_params(key, input_size, kernel_size, conv_channels, dense_size, nclass):
    params = {"conv": []}
    _, h, w = input_size
    for ii, (cin, cout) in enumerate(zip(conv_channels, conv_channels[1:])):
        kh, kw = kernel_size[ii]
        key, k1, k2 = jax.random.split(key, 3)
        scale = 1.0 / (cin * kh * kw) ** 0.5
        params["conv"].append({
            "w": jax.random.uniform(k1, (cout, cin, kh, kw), jnp.float32, -scale, scale),
            "b": jax.random.uniform(k2, (cout,), jnp.float32, -scale, scale),
        })
        h = h // 2                                    # MaxPool((2,1),(2,1)) halves H
    flat_dim = conv_channels[-1] * h * w
    key, k1, k2, k3, k4 = jax.random.split(key, 5)
    s1 = 1.0 / flat_dim ** 0.5
    s2 = 1.0 / dense_size ** 0.5
    params["fc1_w"] = jax.random.uniform(k1, (flat_dim, dense_size), jnp.float32, -s1, s1)
    params["fc1_b"] = jax.random.uniform(k2, (dense_size,), jnp.float32, -s1, s1)
    params["fc2_w"] = jax.random.uniform(k3, (dense_size, nclass), jnp.float32, -s2, s2)
    params["fc2_b"] = jax.random.uniform(k4, (nclass,), jnp.float32, -s2, s2)
    return params


def cnn2d_forward(params, x):
    """x: (N, C, H, W) NCHW, same as the PyTorch module."""
    n, c, h, w = x.shape
    act = x.reshape(n, c, h * w)                      # channel-major flat-spatial
    for layer in params["conv"]:
        wgt, b = layer["w"], layer["b"]
        cout, cin, kh, kw = wgt.shape
        shifts, masks, pad_l, pad_r, sel, out_cols = _conv_layer_constants(h, w, kh, kw)
        xw = jnp.pad(act, ((0, 0), (0, 0), (pad_l, pad_r)))
        wt = wgt.transpose(2, 3, 0, 1).reshape(kh * kw, cout, cin).astype(jnp.bfloat16)
        act = conv_relu_pool(
            xw, wt, b.reshape(cout, 1), jnp.asarray(masks), jnp.asarray(sel),
            shifts=shifts, pad_left=pad_l, HW=h * w, W=w, out_cols=out_cols)
        h = h // 2
    out = act.reshape(n, -1)                          # == PyTorch .view(-1, flat_dim)
    out = fc_head(out,
                  params["fc1_w"].astype(jnp.bfloat16), params["fc1_b"].reshape(1, -1),
                  params["fc2_w"].astype(jnp.bfloat16), params["fc2_b"].reshape(1, -1))
    return out


# Pure-JAX reference (f32) used for a self-check in __main__.
def cnn2d_reference(params, x):
    out = x
    for layer in params["conv"]:
        wgt, b = layer["w"], layer["b"]
        kh, kw = wgt.shape[2], wgt.shape[3]
        out = lax.conv_general_dilated(
            out, wgt, window_strides=(1, 1),
            padding=((kh // 2, kh // 2), (kw // 2, kw // 2)),
            dimension_numbers=("NCHW", "OIHW", "NCHW"))
        out = jnp.maximum(out + b.reshape(1, -1, 1, 1), 0.0)
        n, c, hh, ww = out.shape
        ho = hh // 2
        out = out[:, :, :2 * ho, :].reshape(n, c, ho, 2, ww).max(axis=3)
    out = out.reshape(out.shape[0], -1)
    out = jnp.maximum(out @ params["fc1_w"] + params["fc1_b"], 0.0)
    out = out @ params["fc2_w"] + params["fc2_b"]
    return out


if __name__ == "__main__":
    input_size = (4, 16, 16)                          # (C, H, W)
    kernel_size = [(3, 3), (3, 3)]
    conv_channels = [4, 8, 8]
    dense_size = 32
    nclass = 5
    batch = 2

    key = jax.random.PRNGKey(0)
    key, kx = jax.random.split(key)
    x = jax.random.normal(kx, (batch,) + input_size, jnp.float32)

    params = init_cnn2d_params(key, input_size, kernel_size, conv_channels,
                               dense_size, nclass)

    fwd = jax.jit(cnn2d_forward)
    out = jax.block_until_ready(fwd(params, x))
    assert out.shape == (batch, nclass), out.shape

    ref = jax.block_until_ready(cnn2d_reference(params, x))
    np.testing.assert_allclose(np.asarray(out), np.asarray(ref),
                               rtol=5e-2, atol=5e-2)
    print("KERNEL_OK")
</pallas_src>

<mosaic_0001>
module attributes {stable_mosaic.version = 11 : i64} {
  func.func @_conv_relu_pool_kernel(%arg0: i32, %arg1: memref<1x4x290xf32, #tpu.memory_space<vmem>>, %arg2: memref<9x8x4xbf16, #tpu.memory_space<vmem>>, %arg3: memref<8x1xf32, #tpu.memory_space<vmem>>, %arg4: memref<9x256xf32, #tpu.memory_space<vmem>>, %arg5: memref<240x128xf32, #tpu.memory_space<vmem>>, %arg6: memref<1x8x128xf32, #tpu.memory_space<vmem>>) attributes {dimension_semantics = [#tpu.dimension_semantics<parallel>], iteration_bounds = array<i64: 2>, scalar_prefetch = 0 : i64, scratch_operands = 0 : i64, tpu.core_type = #tpu.core_type<tc>, window_params = [{transform_indices = @transform_0, window_bounds = array<i64: 1, 4, 290>}, {pipeline_mode = #tpu.pipeline_mode<synchronous>, transform_indices = @transform_1, window_bounds = array<i64: 9, 8, 4>}, {pipeline_mode = #tpu.pipeline_mode<synchronous>, transform_indices = @transform_2, window_bounds = array<i64: 8, 1>}, {pipeline_mode = #tpu.pipeline_mode<synchronous>, transform_indices = @transform_3, window_bounds = array<i64: 9, 256>}, {pipeline_mode = #tpu.pipeline_mode<synchronous>, transform_indices = @transform_4, window_bounds = array<i64: 240, 128>}, {transform_indices = @transform_5, window_bounds = array<i64: 1, 8, 128>}]} {
    %c0 = arith.constant 0 : index
    %c0_0 = arith.constant 0 : index
    %c0_1 = arith.constant 0 : index
    %0 = vector.load %arg1[%c0, %c0_0, %c0_1] : memref<1x4x290xf32, #tpu.memory_space<vmem>>, vector<1x4x290xf32>
    %1 = vector.shape_cast %0 : vector<1x4x290xf32> to vector<4x290xf32>
    %c0_2 = arith.constant 0 : index
    %c0_3 = arith.constant 0 : index
    %2 = vector.load %arg4[%c0_2, %c0_3] : memref<9x256xf32, #tpu.memory_space<vmem>>, vector<9x256xf32>
    %cst = arith.constant 0.000000e+00 : f32
    %3 = vector.broadcast %cst : f32 to vector<8x256xf32>
    %4 = vector.extract_strided_slice %1 {offsets = [0, 0], sizes = [4, 256], strides = [1, 1]} : vector<4x290xf32> to vector<4x256xf32>
    %5 = vector.extract_strided_slice %2 {offsets = [0, 0], sizes = [1, 256], strides = [1, 1]} : vector<9x256xf32> to vector<1x256xf32>
    %6 = vector.broadcast %5 : vector<1x256xf32> to vector<4x256xf32>
    %7 = arith.mulf %4, %6 : vector<4x256xf32>
    %c0_4 = arith.constant 0 : index
    %c0_5 = arith.constant 0 : index
    %c0_6 = arith.constant 0 : index
    %8 = vector.load %arg2[%c0_4, %c0_5, %c0_6] : memref<9x8x4xbf16, #tpu.memory_space<vmem>>, vector<1x8x4xbf16>
    %9 = vector.shape_cast %8 : vector<1x8x4xbf16> to vector<8x4xbf16>
    %10 = arith.truncf %7 : vector<4x256xf32> to vector<4x256xbf16>
    %cst_7 = arith.constant dense<0.000000e+00> : vector<8x256xf32>
    %11 = tpu.matmul %9, %10, %cst_7 {dimension_numbers = #tpu.dot_dimension_numbers<[1], [0], [0], [1], [0, 0, 1, 1], [], []>} : vector<8x4xbf16>, vector<4x256xbf16>, vector<8x256xf32> -> vector<8x256xf32>
    %12 = arith.addf %3, %11 : vector<8x256xf32>
    %13 = vector.extract_strided_slice %1 {offsets = [0, 1], sizes = [4, 256], strides = [1, 1]} : vector<4x290xf32> to vector<4x256xf32>
    %14 = vector.extract_strided_slice %2 {offsets = [1, 0], sizes = [1, 256], strides = [1, 1]} : vector<9x256xf32> to vector<1x256xf32>
    %15 = vector.broadcast %14 : vector<1x256xf32> to vector<4x256xf32>
    %16 = arith.mulf %13, %15 : vector<4x256xf32>
    %c1 = arith.constant 1 : index
    %c0_8 = arith.constant 0 : index
    %c0_9 = arith.constant 0 : index
    %17 = vector.load %arg2[%c1, %c0_8, %c0_9] : memref<9x8x4xbf16, #tpu.memory_space<vmem>>, vector<1x8x4xbf16>
    %18 = vector.shape_cast %17 : vector<1x8x4xbf16> to vector<8x4xbf16>
    %19 = arith.truncf %16 : vector<4x256xf32> to vector<4x256xbf16>
    %cst_10 = arith.constant dense<0.000000e+00> : vector<8x256xf32>
    %20 = tpu.matmul %18, %19, %cst_10 {dimension_numbers = #tpu.dot_dimension_numbers<[1], [0], [0], [1], [0, 0, 1, 1], [], []>} : vector<8x4xbf16>, vector<4x256xbf16>, vector<8x256xf32> -> vector<8x256xf32>
    %21 = arith.addf %12, %20 : vector<8x256xf32>
    %22 = vector.extract_strided_slice %1 {offsets = [0, 2], sizes = [4, 256], strides = [1, 1]} : vector<4x290xf32> to vector<4x256xf32>
    %23 = vector.extract_strided_slice %2 {offsets = [2, 0], sizes = [1, 256], strides = [1, 1]} : vector<9x256xf32> to vector<1x256xf32>
    %24 = vector.broadcast %23 : vector<1x256xf32> to vector<4x256xf32>
    %25 = arith.mulf %22, %24 : vector<4x256xf32>
    %c2 = arith.constant 2 : index
    %c0_11 = arith.constant 0 : index
    %c0_12 = arith.constant 0 : index
    %26 = vector.load %arg2[%c2, %c0_11, %c0_12] : memref<9x8x4xbf16, #tpu.memory_space<vmem>>, vector<1x8x4xbf16>
    %27 = vector.shape_cast %26 : vector<1x8x4xbf16> to vector<8x4xbf16>
    %28 = arith.truncf %25 : vector<4x256xf32> to vector<4x256xbf16>
    %cst_13 = arith.constant dense<0.000000e+00> : vector<8x256xf32>
    %29 = tpu.matmul %27, %28, %cst_13 {dimension_numbers = #tpu.dot_dimension_numbers<[1], [0], [0], [1], [0, 0, 1, 1], [], []>} : vector<8x4xbf16>, vector<4x256xbf16>, vector<8x256xf32> -> vector<8x256xf32>
    %30 = arith.addf %21, %29 : vector<8x256xf32>
    %31 = vector.extract_strided_slice %1 {offsets = [0, 16], sizes = [4, 256], strides = [1, 1]} : vector<4x290xf32> to vector<4x256xf32>
    %32 = vector.extract_strided_slice %2 {offsets = [3, 0], sizes = [1, 256], strides = [1, 1]} : vector<9x256xf32> to vector<1x256xf32>
    %33 = vector.broadcast %32 : vector<1x256xf32> to vector<4x256xf32>
    %34 = arith.mulf %31, %33 : vector<4x256xf32>
    %c3 = arith.constant 3 : index
    %c0_14 = arith.constant 0 : index
    %c0_15 = arith.constant 0 : index
    %35 = vector.load %arg2[%c3, %c0_14, %c0_15] : memref<9x8x4xbf16, #tpu.memory_space<vmem>>, vector<1x8x4xbf16>
    %36 = vector.shape_cast %35 : vector<1x8x4xbf16> to vector<8x4xbf16>
    %37 = arith.truncf %34 : vector<4x256xf32> to vector<4x256xbf16>
    %cst_16 = arith.constant dense<0.000000e+00> : vector<8x256xf32>
    %38 = tpu.matmul %36, %37, %cst_16 {dimension_numbers = #tpu.dot_dimension_numbers<[1], [0], [0], [1], [0, 0, 1, 1], [], []>} : vector<8x4xbf16>, vector<4x256xbf16>, vector<8x256xf32> -> vector<8x256xf32>
    %39 = arith.addf %30, %38 : vector<8x256xf32>
    %40 = vector.extract_strided_slice %1 {offsets = [0, 17], sizes = [4, 256], strides = [1, 1]} : vector<4x290xf32> to vector<4x256xf32>
    %41 = vector.extract_strided_slice %2 {offsets = [4, 0], sizes = [1, 256], strides = [1, 1]} : vector<9x256xf32> to vector<1x256xf32>
    %42 = vector.broadcast %41 : vector<1x256xf32> to vector<4x256xf32>
    %43 = arith.mulf %40, %42 : vector<4x256xf32>
    %c4 = arith.constant 4 : index
    %c0_17 = arith.constant 0 : index
    %c0_18 = arith.constant 0 : index
    %44 = vector.load %arg2[%c4, %c0_17, %c0_18] : memref<9x8x4xbf16, #tpu.memory_space<vmem>>, vector<1x8x4xbf16>
    %45 = vector.shape_cast %44 : vector<1x8x4xbf16> to vector<8x4xbf16>
    %46 = arith.truncf %43 : vector<4x256xf32> to vector<4x256xbf16>
    %cst_19 = arith.constant dense<0.000000e+00> : vector<8x256xf32>
    %47 = tpu.matmul %45, %46, %cst_19 {dimension_numbers = #tpu.dot_dimension_numbers<[1], [0], [0], [1], [0, 0, 1, 1], [], []>} : vector<8x4xbf16>, vector<4x256xbf16>, vector<8x256xf32> -> vector<8x256xf32>
    %48 = arith.addf %39, %47 : vector<8x256xf32>
    %49 = vector.extract_strided_slice %1 {offsets = [0, 18], sizes = [4, 256], strides = [1, 1]} : vector<4x290xf32> to vector<4x256xf32>
    %50 = vector.extract_strided_slice %2 {offsets = [5, 0], sizes = [1, 256], strides = [1, 1]} : vector<9x256xf32> to vector<1x256xf32>
    %51 = vector.broadcast %50 : vector<1x256xf32> to vector<4x256xf32>
    %52 = arith.mulf %49, %51 : vector<4x256xf32>
    %c5 = arith.constant 5 : index
    %c0_20 = arith.constant 0 : index
    %c0_21 = arith.constant 0 : index
    %53 = vector.load %arg2[%c5, %c0_20, %c0_21] : memref<9x8x4xbf16, #tpu.memory_space<vmem>>, vector<1x8x4xbf16>
    %54 = vector.shape_cast %53 : vector<1x8x4xbf16> to vector<8x4xbf16>
    %55 = arith.truncf %52 : vector<4x256xf32> to vector<4x256xbf16>
    %cst_22 = arith.constant dense<0.000000e+00> : vector<8x256xf32>
    %56 = tpu.matmul %54, %55, %cst_22 {dimension_numbers = #tpu.dot_dimension_numbers<[1], [0], [0], [1], [0, 0, 1, 1], [], []>} : vector<8x4xbf16>, vector<4x256xbf16>, vector<8x256xf32> -> vector<8x256xf32>
    %57 = arith.addf %48, %56 : vector<8x256xf32>
    %58 = vector.extract_strided_slice %1 {offsets = [0, 32], sizes = [4, 256], strides = [1, 1]} : vector<4x290xf32> to vector<4x256xf32>
    %59 = vector.extract_strided_slice %2 {offsets = [6, 0], sizes = [1, 256], strides = [1, 1]} : vector<9x256xf32> to vector<1x256xf32>
    %60 = vector.broadcast %59 : vector<1x256xf32> to vector<4x256xf32>
    %61 = arith.mulf %58, %60 : vector<4x256xf32>
    %c6 = arith.constant 6 : index
    %c0_23 = arith.constant 0 : index
    %c0_24 = arith.constant 0 : index
    %62 = vector.load %arg2[%c6, %c0_23, %c0_24] : memref<9x8x4xbf16, #tpu.memory_space<vmem>>, vector<1x8x4xbf16>
    %63 = vector.shape_cast %62 : vector<1x8x4xbf16> to vector<8x4xbf16>
    %64 = arith.truncf %61 : vector<4x256xf32> to vector<4x256xbf16>
    %cst_25 = arith.constant dense<0.000000e+00> : vector<8x256xf32>
    %65 = tpu.matmul %63, %64, %cst_25 {dimension_numbers = #tpu.dot_dimension_numbers<[1], [0], [0], [1], [0, 0, 1, 1], [], []>} : vector<8x4xbf16>, vector<4x256xbf16>, vector<8x256xf32> -> vector<8x256xf32>
    %66 = arith.addf %57, %65 : vector<8x256xf32>
    %67 = vector.extract_strided_slice %1 {offsets = [0, 33], sizes = [4, 256], strides = [1, 1]} : vector<4x290xf32> to vector<4x256xf32>
    %68 = vector.extract_strided_slice %2 {offsets = [7, 0], sizes = [1, 256], strides = [1, 1]} : vector<9x256xf32> to vector<1x256xf32>
    %69 = vector.broadcast %68 : vector<1x256xf32> to vector<4x256xf32>
    %70 = arith.mulf %67, %69 : vector<4x256xf32>
    %c7 = arith.constant 7 : index
    %c0_26 = arith.constant 0 : index
    %c0_27 = arith.constant 0 : index
    %71 = vector.load %arg2[%c7, %c0_26, %c0_27] : memref<9x8x4xbf16, #tpu.memory_space<vmem>>, vector<1x8x4xbf16>
    %72 = vector.shape_cast %71 : vector<1x8x4xbf16> to vector<8x4xbf16>
    %73 = arith.truncf %70 : vector<4x256xf32> to vector<4x256xbf16>
    %cst_28 = arith.constant dense<0.000000e+00> : vector<8x256xf32>
    %74 = tpu.matmul %72, %73, %cst_28 {dimension_numbers = #tpu.dot_dimension_numbers<[1], [0], [0], [1], [0, 0, 1, 1], [], []>} : vector<8x4xbf16>, vector<4x256xbf16>, vector<8x256xf32> -> vector<8x256xf32>
    %75 = arith.addf %66, %74 : vector<8x256xf32>
    %76 = vector.extract_strided_slice %1 {offsets = [0, 34], sizes = [4, 256], strides = [1, 1]} : vector<4x290xf32> to vector<4x256xf32>
    %77 = vector.extract_strided_slice %2 {offsets = [8, 0], sizes = [1, 256], strides = [1, 1]} : vector<9x256xf32> to vector<1x256xf32>
    %78 = vector.broadcast %77 : vector<1x256xf32> to vector<4x256xf32>
    %79 = arith.mulf %76, %78 : vector<4x256xf32>
    %c8 = arith.constant 8 : index
    %c0_29 = arith.constant 0 : index
    %c0_30 = arith.constant 0 : index
    %80 = vector.load %arg2[%c8, %c0_29, %c0_30] : memref<9x8x4xbf16, #tpu.memory_space<vmem>>, vector<1x8x4xbf16>
    %81 = vector.shape_cast %80 : vector<1x8x4xbf16> to vector<8x4xbf16>
    %82 = arith.truncf %79 : vector<4x256xf32> to vector<4x256xbf16>
    %cst_31 = arith.constant dense<0.000000e+00> : vector<8x256xf32>
    %83 = tpu.matmul %81, %82, %cst_31 {dimension_numbers = #tpu.dot_dimension_numbers<[1], [0], [0], [1], [0, 0, 1, 1], [], []>} : vector<8x4xbf16>, vector<4x256xbf16>, vector<8x256xf32> -> vector<8x256xf32>
    %84 = arith.addf %75, %83 : vector<8x256xf32>
    %c0_32 = arith.constant 0 : index
    %c0_33 = arith.constant 0 : index
    %85 = vector.load %arg3[%c0_32, %c0_33] : memref<8x1xf32, #tpu.memory_space<vmem>>, vector<8x1xf32>
    %86 = vector.broadcast %85 : vector<8x1xf32> to vector<8x256xf32>
    %87 = arith.addf %84, %86 : vector<8x256xf32>
    %cst_34 = arith.constant 0.000000e+00 : f32
    %88 = vector.broadcast %cst_34 : f32 to vector<8x256xf32>
    %89 = arith.maximumf %87, %88 : vector<8x256xf32>
    %90 = vector.extract_strided_slice %89 {offsets = [0, 0], sizes = [8, 240], strides = [1, 1]} : vector<8x256xf32> to vector<8x240xf32>
    %91 = vector.extract_strided_slice %89 {offsets = [0, 16], sizes = [8, 240], strides = [1, 1]} : vector<8x256xf32> to vector<8x240xf32>
    %92 = arith.maximumf %90, %91 : vector<8x240xf32>
    %c0_35 = arith.constant 0 : index
    %c0_36 = arith.constant 0 : index
    %93 = vector.load %arg5[%c0_35, %c0_36] : memref<240x128xf32, #tpu.memory_space<vmem>>, vector<240x128xf32>
    %cst_37 = arith.constant dense<0.000000e+00> : vector<8x128xf32>
    %94 = tpu.matmul %92, %93, %cst_37 {dimension_numbers = #tpu.dot_dimension_numbers<[1], [0], [0], [1], [0, 0, 1, 1], [], []>} : vector<8x240xf32>, vector<240x128xf32>, vector<8x128xf32> -> vector<8x128xf32>
    %c0_38 = arith.constant 0 : index
    %c0_39 = arith.constant 0 : index
    %c0_40 = arith.constant 0 : index
    %95 = vector.load %arg6[%c0_38, %c0_39, %c0_40] : memref<1x8x128xf32, #tpu.memory_space<vmem>>, vector<1x8x128xf32>
    %96 = vector.shape_cast %95 : vector<1x8x128xf32> to vector<8x128xf32>
    %97 = vector.shape_cast %94 : vector<8x128xf32> to vector<1x8x128xf32>
    tpu.vector_store %arg6[%c0_38, %c0_39, %c0_40], %97 {strides = array<i32>} : memref<1x8x128xf32, #tpu.memory_space<vmem>>, vector<1x8x128xf32>,
    return
  }
  func.func @transform_0(%arg0: i32) -> (i32, i32, i32) {
    %c0_i32 = arith.constant 0 : i32
    %c0_i32_0 = arith.constant 0 : i32
    %c0_i32_1 = arith.constant 0 : i32
    return %arg0, %c0_i32, %c0_i32_0 : i32, i32, i32
  }
  func.func @transform_1(%arg0: i32) -> (i32, i32, i32) {
    %c0_i32 = arith.constant 0 : i32
    %c0_i32_0 = arith.constant 0 : i32
    %c0_i32_1 = arith.constant 0 : i32
    %c0_i32_2 = arith.constant 0 : i32
    return %c0_i32, %c0_i32_0, %c0_i32_1 : i32, i32, i32
  }
  func.func @transform_2(%arg0: i32) -> (i32, i32) {
    %c0_i32 = arith.constant 0 : i32
    %c0_i32_0 = arith.constant 0 : i32
    %c0_i32_1 = arith.constant 0 : i32
    return %c0_i32, %c0_i32_0 : i32, i32
  }
  func.func @transform_3(%arg0: i32) -> (i32, i32) {
    %c0_i32 = arith.constant 0 : i32
    %c0_i32_0 = arith.constant 0 : i32
    %c0_i32_1 = arith.constant 0 : i32
    return %c0_i32, %c0_i32_0 : i32, i32
  }
  func.func @transform_4(%arg0: i32) -> (i32, i32) {
    %c0_i32 = arith.constant 0 : i32
    %c0_i32_0 = arith.constant 0 : i32
    %c0_i32_1 = arith.constant 0 : i32
    return %c0_i32, %c0_i32_0 : i32, i32
  }
  func.func @transform_5(%arg0: i32) -> (i32, i32, i32) {
    %c0_i32 = arith.constant 0 : i32
    %c0_i32_0 = arith.constant 0 : i32
    %c0_i32_1 = arith.constant 0 : i32
    return %arg0, %c0_i32, %c0_i32_0 : i32, i32, i32
  }
}

module attributes {stable_mosaic.version = 11 : i64} {
  func.func @_conv_relu_pool_kernel(%arg0: i32, %arg1: memref<1x8x162xf32, #tpu.memory_space<vmem>>, %arg2: memref<9x8x8xbf16, #tpu.memory_space<vmem>>, %arg3: memref<8x1xf32, #tpu.memory_space<vmem>>, %arg4: memref<9x128xf32, #tpu.memory_space<vmem>>, %arg5: memref<112x64xf32, #tpu.memory_space<vmem>>, %arg6: memref<1x8x64xf32, #tpu.memory_space<vmem>>) attributes {dimension_semantics = [#tpu.dimension_semantics<parallel>], iteration_bounds = array<i64: 2>, scalar_prefetch = 0 : i64, scratch_operands = 0 : i64, tpu.core_type = #tpu.core_type<tc>, window_params = [{transform_indices = @transform_0, window_bounds = array<i64: 1, 8, 162>}, {pipeline_mode = #tpu.pipeline_mode<synchronous>, transform_indices = @transform_1, window_bounds = array<i64: 9, 8, 8>}, {pipeline_mode = #tpu.pipeline_mode<synchronous>, transform_indices = @transform_2, window_bounds = array<i64: 8, 1>}, {pipeline_mode = #tpu.pipeline_mode<synchronous>, transform_indices = @transform_3, window_bounds = array<i64: 9, 128>}, {pipeline_mode = #tpu.pipeline_mode<synchronous>, transform_indices = @transform_4, window_bounds = array<i64: 112, 64>}, {transform_indices = @transform_5, window_bounds = array<i64: 1, 8, 64>}]} {
    %c0 = arith.constant 0 : index
    %c0_0 = arith.constant 0 : index
    %c0_1 = arith.constant 0 : index
    %0 = vector.load %arg1[%c0, %c0_0, %c0_1] : memref<1x8x162xf32, #tpu.memory_space<vmem>>, vector<1x8x162xf32>
    %1 = vector.shape_cast %0 : vector<1x8x162xf32> to vector<8x162xf32>
    %c0_2 = arith.constant 0 : index
    %c0_3 = arith.constant 0 : index
    %2 = vector.load %arg4[%c0_2, %c0_3] : memref<9x128xf32, #tpu.memory_space<vmem>>, vector<9x128xf32>
    %cst = arith.constant 0.000000e+00 : f32
    %3 = vector.broadcast %cst : f32 to vector<8x128xf32>
    %4 = vector.extract_strided_slice %1 {offsets = [0, 0], sizes = [8, 128], strides = [1, 1]} : vector<8x162xf32> to vector<8x128xf32>
    %5 = vector.extract_strided_slice %2 {offsets = [0, 0], sizes = [1, 128], strides = [1, 1]} : vector<9x128xf32> to vector<1x128xf32>
    %6 = vector.broadcast %5 : vector<1x128xf32> to vector<8x128xf32>
    %7 = arith.mulf %4, %6 : vector<8x128xf32>
    %c0_4 = arith.constant 0 : index
    %c0_5 = arith.constant 0 : index
    %c0_6 = arith.constant 0 : index
    %8 = vector.load %arg2[%c0_4, %c0_5, %c0_6] : memref<9x8x8xbf16, #tpu.memory_space<vmem>>, vector<1x8x8xbf16>
    %9 = vector.shape_cast %8 : vector<1x8x8xbf16> to vector<8x8xbf16>
    %10 = arith.truncf %7 : vector<8x128xf32> to vector<8x128xbf16>
    %cst_7 = arith.constant dense<0.000000e+00> : vector<8x128xf32>
    %11 = tpu.matmul %9, %10, %cst_7 {dimension_numbers = #tpu.dot_dimension_numbers<[1], [0], [0], [1], [0, 0, 1, 1], [], []>} : vector<8x8xbf16>, vector<8x128xbf16>, vector<8x128xf32> -> vector<8x128xf32>
    %12 = arith.addf %3, %11 : vector<8x128xf32>
    %13 = vector.extract_strided_slice %1 {offsets = [0, 1], sizes = [8, 128], strides = [1, 1]} : vector<8x162xf32> to vector<8x128xf32>
    %14 = vector.extract_strided_slice %2 {offsets = [1, 0], sizes = [1, 128], strides = [1, 1]} : vector<9x128xf32> to vector<1x128xf32>
    %15 = vector.broadcast %14 : vector<1x128xf32> to vector<8x128xf32>
    %16 = arith.mulf %13, %15 : vector<8x128xf32>
    %c1 = arith.constant 1 : index
    %c0_8 = arith.constant 0 : index
    %c0_9 = arith.constant 0 : index
    %17 = vector.load %arg2[%c1, %c0_8, %c0_9] : memref<9x8x8xbf16, #tpu.memory_space<vmem>>, vector<1x8x8xbf16>
    %18 = vector.shape_cast %17 : vector<1x8x8xbf16> to vector<8x8xbf16>
    %19 = arith.truncf %16 : vector<8x128xf32> to vector<8x128xbf16>
    %cst_10 = arith.constant dense<0.000000e+00> : vector<8x128xf32>
    %20 = tpu.matmul %18, %19, %cst_10 {dimension_numbers = #tpu.dot_dimension_numbers<[1], [0], [0], [1], [0, 0, 1, 1], [], []>} : vector<8x8xbf16>, vector<8x128xbf16>, vector<8x128xf32> -> vector<8x128xf32>
    %21 = arith.addf %12, %20 : vector<8x128xf32>
    %22 = vector.extract_strided_slice %1 {offsets = [0, 2], sizes = [8, 128], strides = [1, 1]} : vector<8x162xf32> to vector<8x128xf32>
    %23 = vector.extract_strided_slice %2 {offsets = [2, 0], sizes = [1, 128], strides = [1, 1]} : vector<9x128xf32> to vector<1x128xf32>
    %24 = vector.broadcast %23 : vector<1x128xf32> to vector<8x128xf32>
    %25 = arith.mulf %22, %24 : vector<8x128xf32>
    %c2 = arith.constant 2 : index
    %c0_11 = arith.constant 0 : index
    %c0_12 = arith.constant 0 : index
    %26 = vector.load %arg2[%c2, %c0_11, %c0_12] : memref<9x8x8xbf16, #tpu.memory_space<vmem>>, vector<1x8x8xbf16>
    %27 = vector.shape_cast %26 : vector<1x8x8xbf16> to vector<8x8xbf16>
    %28 = arith.truncf %25 : vector<8x128xf32> to vector<8x128xbf16>
    %cst_13 = arith.constant dense<0.000000e+00> : vector<8x128xf32>
    %29 = tpu.matmul %27, %28, %cst_13 {dimension_numbers = #tpu.dot_dimension_numbers<[1], [0], [0], [1], [0, 0, 1, 1], [], []>} : vector<8x8xbf16>, vector<8x128xbf16>, vector<8x128xf32> -> vector<8x128xf32>
    %30 = arith.addf %21, %29 : vector<8x128xf32>
    %31 = vector.extract_strided_slice %1 {offsets = [0, 16], sizes = [8, 128], strides = [1, 1]} : vector<8x162xf32> to vector<8x128xf32>
    %32 = vector.extract_strided_slice %2 {offsets = [3, 0], sizes = [1, 128], strides = [1, 1]} : vector<9x128xf32> to vector<1x128xf32>
    %33 = vector.broadcast %32 : vector<1x128xf32> to vector<8x128xf32>
    %34 = arith.mulf %31, %33 : vector<8x128xf32>
    %c3 = arith.constant 3 : index
    %c0_14 = arith.constant 0 : index
    %c0_15 = arith.constant 0 : index
    %35 = vector.load %arg2[%c3, %c0_14, %c0_15] : memref<9x8x8xbf16, #tpu.memory_space<vmem>>, vector<1x8x8xbf16>
    %36 = vector.shape_cast %35 : vector<1x8x8xbf16> to vector<8x8xbf16>
    %37 = arith.truncf %34 : vector<8x128xf32> to vector<8x128xbf16>
    %cst_16 = arith.constant dense<0.000000e+00> : vector<8x128xf32>
    %38 = tpu.matmul %36, %37, %cst_16 {dimension_numbers = #tpu.dot_dimension_numbers<[1], [0], [0], [1], [0, 0, 1, 1], [], []>} : vector<8x8xbf16>, vector<8x128xbf16>, vector<8x128xf32> -> vector<8x128xf32>
    %39 = arith.addf %30, %38 : vector<8x128xf32>
    %40 = vector.extract_strided_slice %1 {offsets = [0, 17], sizes = [8, 128], strides = [1, 1]} : vector<8x162xf32> to vector<8x128xf32>
    %41 = vector.extract_strided_slice %2 {offsets = [4, 0], sizes = [1, 128], strides = [1, 1]} : vector<9x128xf32> to vector<1x128xf32>
    %42 = vector.broadcast %41 : vector<1x128xf32> to vector<8x128xf32>
    %43 = arith.mulf %40, %42 : vector<8x128xf32>
    %c4 = arith.constant 4 : index
    %c0_17 = arith.constant 0 : index
    %c0_18 = arith.constant 0 : index
    %44 = vector.load %arg2[%c4, %c0_17, %c0_18] : memref<9x8x8xbf16, #tpu.memory_space<vmem>>, vector<1x8x8xbf16>
    %45 = vector.shape_cast %44 : vector<1x8x8xbf16> to vector<8x8xbf16>
    %46 = arith.truncf %43 : vector<8x128xf32> to vector<8x128xbf16>
    %cst_19 = arith.constant dense<0.000000e+00> : vector<8x128xf32>
    %47 = tpu.matmul %45, %46, %cst_19 {dimension_numbers = #tpu.dot_dimension_numbers<[1], [0], [0], [1], [0, 0, 1, 1], [], []>} : vector<8x8xbf16>, vector<8x128xbf16>, vector<8x128xf32> -> vector<8x128xf32>
    %48 = arith.addf %39, %47 : vector<8x128xf32>
    %49 = vector.extract_strided_slice %1 {offsets = [0, 18], sizes = [8, 128], strides = [1, 1]} : vector<8x162xf32> to vector<8x128xf32>
    %50 = vector.extract_strided_slice %2 {offsets = [5, 0], sizes = [1, 128], strides = [1, 1]} : vector<9x128xf32> to vector<1x128xf32>
    %51 = vector.broadcast %50 : vector<1x128xf32> to vector<8x128xf32>
    %52 = arith.mulf %49, %51 : vector<8x128xf32>
    %c5 = arith.constant 5 : index
    %c0_20 = arith.constant 0 : index
    %c0_21 = arith.constant 0 : index
    %53 = vector.load %arg2[%c5, %c0_20, %c0_21] : memref<9x8x8xbf16, #tpu.memory_space<vmem>>, vector<1x8x8xbf16>
    %54 = vector.shape_cast %53 : vector<1x8x8xbf16> to vector<8x8xbf16>
    %55 = arith.truncf %52 : vector<8x128xf32> to vector<8x128xbf16>
    %cst_22 = arith.constant dense<0.000000e+00> : vector<8x128xf32>
    %56 = tpu.matmul %54, %55, %cst_22 {dimension_numbers = #tpu.dot_dimension_numbers<[1], [0], [0], [1], [0, 0, 1, 1], [], []>} : vector<8x8xbf16>, vector<8x128xbf16>, vector<8x128xf32> -> vector<8x128xf32>
    %57 = arith.addf %48, %56 : vector<8x128xf32>
    %58 = vector.extract_strided_slice %1 {offsets = [0, 32], sizes = [8, 128], strides = [1, 1]} : vector<8x162xf32> to vector<8x128xf32>
    %59 = vector.extract_strided_slice %2 {offsets = [6, 0], sizes = [1, 128], strides = [1, 1]} : vector<9x128xf32> to vector<1x128xf32>
    %60 = vector.broadcast %59 : vector<1x128xf32> to vector<8x128xf32>
    %61 = arith.mulf %58, %60 : vector<8x128xf32>
    %c6 = arith.constant 6 : index
    %c0_23 = arith.constant 0 : index
    %c0_24 = arith.constant 0 : index
    %62 = vector.load %arg2[%c6, %c0_23, %c0_24] : memref<9x8x8xbf16, #tpu.memory_space<vmem>>, vector<1x8x8xbf16>
    %63 = vector.shape_cast %62 : vector<1x8x8xbf16> to vector<8x8xbf16>
    %64 = arith.truncf %61 : vector<8x128xf32> to vector<8x128xbf16>
    %cst_25 = arith.constant dense<0.000000e+00> : vector<8x128xf32>
    %65 = tpu.matmul %63, %64, %cst_25 {dimension_numbers = #tpu.dot_dimension_numbers<[1], [0], [0], [1], [0, 0, 1, 1], [], []>} : vector<8x8xbf16>, vector<8x128xbf16>, vector<8x128xf32> -> vector<8x128xf32>
    %66 = arith.addf %57, %65 : vector<8x128xf32>
    %67 = vector.extract_strided_slice %1 {offsets = [0, 33], sizes = [8, 128], strides = [1, 1]} : vector<8x162xf32> to vector<8x128xf32>
    %68 = vector.extract_strided_slice %2 {offsets = [7, 0], sizes = [1, 128], strides = [1, 1]} : vector<9x128xf32> to vector<1x128xf32>
    %69 = vector.broadcast %68 : vector<1x128xf32> to vector<8x128xf32>
    %70 = arith.mulf %67, %69 : vector<8x128xf32>
    %c7 = arith.constant 7 : index
    %c0_26 = arith.constant 0 : index
    %c0_27 = arith.constant 0 : index
    %71 = vector.load %arg2[%c7, %c0_26, %c0_27] : memref<9x8x8xbf16, #tpu.memory_space<vmem>>, vector<1x8x8xbf16>
    %72 = vector.shape_cast %71 : vector<1x8x8xbf16> to vector<8x8xbf16>
    %73 = arith.truncf %70 : vector<8x128xf32> to vector<8x128xbf16>
    %cst_28 = arith.constant dense<0.000000e+00> : vector<8x128xf32>
    %74 = tpu.matmul %72, %73, %cst_28 {dimension_numbers = #tpu.dot_dimension_numbers<[1], [0], [0], [1], [0, 0, 1, 1], [], []>} : vector<8x8xbf16>, vector<8x128xbf16>, vector<8x128xf32> -> vector<8x128xf32>
    %75 = arith.addf %66, %74 : vector<8x128xf32>
    %76 = vector.extract_strided_slice %1 {offsets = [0, 34], sizes = [8, 128], strides = [1, 1]} : vector<8x162xf32> to vector<8x128xf32>
    %77 = vector.extract_strided_slice %2 {offsets = [8, 0], sizes = [1, 128], strides = [1, 1]} : vector<9x128xf32> to vector<1x128xf32>
    %78 = vector.broadcast %77 : vector<1x128xf32> to vector<8x128xf32>
    %79 = arith.mulf %76, %78 : vector<8x128xf32>
    %c8 = arith.constant 8 : index
    %c0_29 = arith.constant 0 : index
    %c0_30 = arith.constant 0 : index
    %80 = vector.load %arg2[%c8, %c0_29, %c0_30] : memref<9x8x8xbf16, #tpu.memory_space<vmem>>, vector<1x8x8xbf16>
    %81 = vector.shape_cast %80 : vector<1x8x8xbf16> to vector<8x8xbf16>
    %82 = arith.truncf %79 : vector<8x128xf32> to vector<8x128xbf16>
    %cst_31 = arith.constant dense<0.000000e+00> : vector<8x128xf32>
    %83 = tpu.matmul %81, %82, %cst_31 {dimension_numbers = #tpu.dot_dimension_numbers<[1], [0], [0], [1], [0, 0, 1, 1], [], []>} : vector<8x8xbf16>, vector<8x128xbf16>, vector<8x128xf32> -> vector<8x128xf32>
    %84 = arith.addf %75, %83 : vector<8x128xf32>
    %c0_32 = arith.constant 0 : index
    %c0_33 = arith.constant 0 : index
    %85 = vector.load %arg3[%c0_32, %c0_33] : memref<8x1xf32, #tpu.memory_space<vmem>>, vector<8x1xf32>
    %86 = vector.broadcast %85 : vector<8x1xf32> to vector<8x128xf32>
    %87 = arith.addf %84, %86 : vector<8x128xf32>
    %cst_34 = arith.constant 0.000000e+00 : f32
    %88 = vector.broadcast %cst_34 : f32 to vector<8x128xf32>
    %89 = arith.maximumf %87, %88 : vector<8x128xf32>
    %90 = vector.extract_strided_slice %89 {offsets = [0, 0], sizes = [8, 112], strides = [1, 1]} : vector<8x128xf32> to vector<8x112xf32>
    %91 = vector.extract_strided_slice %89 {offsets = [0, 16], sizes = [8, 112], strides = [1, 1]} : vector<8x128xf32> to vector<8x112xf32>
    %92 = arith.maximumf %90, %91 : vector<8x112xf32>
    %c0_35 = arith.constant 0 : index
    %c0_36 = arith.constant 0 : index
    %93 = vector.load %arg5[%c0_35, %c0_36] : memref<112x64xf32, #tpu.memory_space<vmem>>, vector<112x64xf32>
    %cst_37 = arith.constant dense<0.000000e+00> : vector<8x64xf32>
    %94 = tpu.matmul %92, %93, %cst_37 {dimension_numbers = #tpu.dot_dimension_numbers<[1], [0], [0], [1], [0, 0, 1, 1], [], []>} : vector<8x112xf32>, vector<112x64xf32>, vector<8x64xf32> -> vector<8x64xf32>
    %c0_38 = arith.constant 0 : index
    %c0_39 = arith.constant 0 : index
    %c0_40 = arith.constant 0 : index
    %95 = vector.load %arg6[%c0_38, %c0_39, %c0_40] : memref<1x8x64xf32, #tpu.memory_space<vmem>>, vector<1x8x64xf32>
    %96 = vector.shape_cast %95 : vector<1x8x64xf32> to vector<8x64xf32>
    %97 = vector.shape_cast %94 : vector<8x64xf32> to vector<1x8x64xf32>
    tpu.vector_store %arg6[%c0_38, %c0_39, %c0_40], %97 {strides = array<i32>} : memref<1x8x64xf32, #tpu.memory_space<vmem>>, vector<1x8x64xf32>,
    return
  }
  func.func @transform_0(%arg0: i32) -> (i32, i32, i32) {
    %c0_i32 = arith.constant 0 : i32
    %c0_i32_0 = arith.constant 0 : i32
    %c0_i32_1 = arith.constant 0 : i32
    return %arg0, %c0_i32, %c0_i32_0 : i32, i32, i32
  }
  func.func @transform_1(%arg0: i32) -> (i32, i32, i32) {
    %c0_i32 = arith.constant 0 : i32
    %c0_i32_0 = arith.constant 0 : i32
    %c0_i32_1 = arith.constant 0 : i32
    %c0_i32_2 = arith.constant 0 : i32
    return %c0_i32, %c0_i32_0, %c0_i32_1 : i32, i32, i32
  }
  func.func @transform_2(%arg0: i32) -> (i32, i32) {
    %c0_i32 = arith.constant 0 : i32
    %c0_i32_0 = arith.constant 0 : i32
    %c0_i32_1 = arith.constant 0 : i32
    return %c0_i32, %c0_i32_0 : i32, i32
  }
  func.func @transform_3(%arg0: i32) -> (i32, i32) {
    %c0_i32 = arith.constant 0 : i32
    %c0_i32_0 = arith.constant 0 : i32
    %c0_i32_1 = arith.constant 0 : i32
    return %c0_i32, %c0_i32_0 : i32, i32
  }
  func.func @transform_4(%arg0: i32) -> (i32, i32) {
    %c0_i32 = arith.constant 0 : i32
    %c0_i32_0 = arith.constant 0 : i32
    %c0_i32_1 = arith.constant 0 : i32
    return %c0_i32, %c0_i32_0 : i32, i32
  }
  func.func @transform_5(%arg0: i32) -> (i32, i32, i32) {
    %c0_i32 = arith.constant 0 : i32
    %c0_i32_0 = arith.constant 0 : i32
    %c0_i32_1 = arith.constant 0 : i32
    return %arg0, %c0_i32, %c0_i32_0 : i32, i32, i32
  }
}

module attributes {stable_mosaic.version = 11 : i64} {
  func.func @_fc_head_kernel(%arg0: i32, %arg1: memref<2x512xf32, #tpu.memory_space<vmem>>, %arg2: memref<512x32xbf16, #tpu.memory_space<vmem>>, %arg3: memref<1x32xf32, #tpu.memory_space<vmem>>, %arg4: memref<32x5xbf16, #tpu.memory_space<vmem>>, %arg5: memref<1x5xf32, #tpu.memory_space<vmem>>, %arg6: memref<2x5xf32, #tpu.memory_space<vmem>>) attributes {dimension_semantics = [#tpu.dimension_semantics<parallel>], iteration_bounds = array<i64: 1>, scalar_prefetch = 0 : i64, scratch_operands = 0 : i64, tpu.core_type = #tpu.core_type<tc>, window_params = [{transform_indices = @transform_0, window_bounds = array<i64: 2, 512>}, {pipeline_mode = #tpu.pipeline_mode<synchronous>, transform_indices = @transform_1, window_bounds = array<i64: 512, 32>}, {pipeline_mode = #tpu.pipeline_mode<synchronous>, transform_indices = @transform_2, window_bounds = array<i64: 1, 32>}, {pipeline_mode = #tpu.pipeline_mode<synchronous>, transform_indices = @transform_3, window_bounds = array<i64: 32, 5>}, {pipeline_mode = #tpu.pipeline_mode<synchronous>, transform_indices = @transform_4, window_bounds = array<i64: 1, 5>}, {transform_indices = @transform_5, window_bounds = array<i64: 2, 5>}]} {
    %c0 = arith.constant 0 : index
    %c0_0 = arith.constant 0 : index
    %0 = vector.load %arg1[%c0, %c0_0] : memref<2x512xf32, #tpu.memory_space<vmem>>, vector<2x512xf32>
    %1 = arith.truncf %0 : vector<2x512xf32> to vector<2x512xbf16>
    %c0_1 = arith.constant 0 : index
    %c0_2 = arith.constant 0 : index
    %2 = vector.load %arg2[%c0_1, %c0_2] : memref<512x32xbf16, #tpu.memory_space<vmem>>, vector<512x32xbf16>
    %cst = arith.constant dense<0.000000e+00> : vector<2x32xf32>
    %3 = tpu.matmul %1, %2, %cst {dimension_numbers = #tpu.dot_dimension_numbers<[1], [0], [0], [1], [0, 0, 1, 1], [], []>} : vector<2x512xbf16>, vector<512x32xbf16>, vector<2x32xf32> -> vector<2x32xf32>
    %c0_3 = arith.constant 0 : index
    %c0_4 = arith.constant 0 : index
    %4 = vector.load %arg3[%c0_3, %c0_4] : memref<1x32xf32, #tpu.memory_space<vmem>>, vector<1x32xf32>
    %5 = vector.broadcast %4 : vector<1x32xf32> to vector<2x32xf32>
    %6 = arith.addf %3, %5 : vector<2x32xf32>
    %cst_5 = arith.constant 0.000000e+00 : f32
    %7 = vector.broadcast %cst_5 : f32 to vector<2x32xf32>
    %8 = arith.maximumf %6, %7 : vector<2x32xf32>
    %9 = arith.truncf %8 : vector<2x32xf32> to vector<2x32xbf16>
    %c0_6 = arith.constant 0 : index
    %c0_7 = arith.constant 0 : index
    %10 = vector.load %arg4[%c0_6, %c0_7] : memref<32x5xbf16, #tpu.memory_space<vmem>>, vector<32x5xbf16>
    %cst_8 = arith.constant dense<0.000000e+00> : vector<2x5xf32>
    %11 = tpu.matmul %9, %10, %cst_8 {dimension_numbers = #tpu.dot_dimension_numbers<[1], [0], [0], [1], [0, 0, 1, 1], [], []>} : vector<2x32xbf16>, vector<32x5xbf16>, vector<2x5xf32> -> vector<2x5xf32>
    %c0_9 = arith.constant 0 : index
    %c0_10 = arith.constant 0 : index
    %12 = vector.load %arg5[%c0_9, %c0_10] : memref<1x5xf32, #tpu.memory_space<vmem>>, vector<1x5xf32>
    %13 = vector.broadcast %12 : vector<1x5xf32> to vector<2x5xf32>
    %14 = arith.addf %11, %13 : vector<2x5xf32>
    %c0_11 = arith.constant 0 : index
    %c0_12 = arith.constant 0 : index
    %15 = vector.load %arg6[%c0_11, %c0_12] : memref<2x5xf32, #tpu.memory_space<vmem>>, vector<2x5xf32>
    tpu.vector_store %arg6[%c0_11, %c0_12], %14 {strides = array<i32>} : memref<2x5xf32, #tpu.memory_space<vmem>>, vector<2x5xf32>,
    return
  }
  func.func @transform_0(%arg0: i32) -> (i32, i32) {
    %c0_i32 = arith.constant 0 : i32
    %c0_i32_0 = arith.constant 0 : i32
    return %arg0, %c0_i32 : i32, i32
  }
  func.func @transform_1(%arg0: i32) -> (i32, i32) {
    %c0_i32 = arith.constant 0 : i32
    %c0_i32_0 = arith.constant 0 : i32
    %c0_i32_1 = arith.constant 0 : i32
    return %c0_i32, %c0_i32_0 : i32, i32
  }
  func.func @transform_2(%arg0: i32) -> (i32, i32) {
    %c0_i32 = arith.constant 0 : i32
    %c0_i32_0 = arith.constant 0 : i32
    %c0_i32_1 = arith.constant 0 : i32
    return %c0_i32, %c0_i32_0 : i32, i32
  }
  func.func @transform_3(%arg0: i32) -> (i32, i32) {
    %c0_i32 = arith.constant 0 : i32
    %c0_i32_0 = arith.constant 0 : i32
    %c0_i32_1 = arith.constant 0 : i32
    return %c0_i32, %c0_i32_0 : i32, i32
  }
  func.func @transform_4(%arg0: i32) -> (i32, i32) {
    %c0_i32 = arith.constant 0 : i32
    %c0_i32_0 = arith.constant 0 : i32
    %c0_i32_1 = arith.constant 0 : i32
    return %c0_i32, %c0_i32_0 : i32, i32
  }
  func.func @transform_5(%arg0: i32) -> (i32, i32) {
    %c0_i32 = arith.constant 0 : i32
    %c0_i32_0 = arith.constant 0 : i32
    return %arg0, %c0_i32 : i32, i32
  }
}

</mosaic_0001>

<llo_original>
// kernel: cnn2d_forward.5
$region0: #{cnn2d_forward.5}
  #allocation0 [shape = 'u32[]', space=smem, size = 0x4, offset = 0x4, fixed_abs, tag = 'smem constant byte address 0x4 - core index']
  #allocation1 [shape = 'u32[72,128]{1,0:T(1,128)}', space=vmem, size = 0x9000, scoped, tag = 'internal scratch']
  %s0 = inlined_call_operand.vmem [shape: f32[2,512], index: 0, kind: input, shape index: {}]
  %s1 = inlined_call_operand.vmem [shape: bf16[512,32], index: 1, kind: input, shape index: {}]
  %s2 = inlined_call_operand.vmem [shape: f32[1,32], index: 2, kind: input, shape index: {}]
  %s3 = inlined_call_operand.vmem [shape: bf16[32,5], index: 3, kind: input, shape index: {}]
  %s4 = inlined_call_operand.vmem [shape: f32[1,5], index: 4, kind: input, shape index: {}]
  %s5 = inlined_call_operand.hbm [shape: f32[2,5], index: 5, kind: output, shape index: {}]
  %s6 = sld [smem:[#allocation0]]
  $region30: #{cnn2d_forward.5} parent=0
    _
  %s8 = ssub.s32 1, %s6
  %s9 = scalar_select 0, %s8, %s6
  $region1: #{cnn2d_forward.5} parent=0
    #allocation2 [shape = 'u8[1024]{0}', space=vmem, size = 0x400, scoped, tag = 'output window, operand 0, single buffered']
    #allocation3 [shape = 's32[1]{0}', space=sflag, size = 0x4, scoped, tag = 'scoped memory for cnn2d_forward.5']
    %10 = vsyncpa [#allocation3], 0
    // Predicated region
    $region2: #{cnn2d_forward.5} parent=1 // pred_check
      _
    $region3: #{cnn2d_forward.5} parent=1 // pred_check_branch
      %12 = sbr.rel (0) target = $region5
    $region4: #{cnn2d_forward.5} parent=1 // pred_region
      _
    $region5: #{cnn2d_forward.5} parent=1 // pred_fallthru
      _
    // Predicated region
    $region6: #{cnn2d_forward.5} parent=1 // pred_check
      _
    $region7: #{cnn2d_forward.5} parent=1 // pred_check_branch
      %14 = sbr.rel (0) target = $region9
    $region8: #{cnn2d_forward.5} parent=1 // pred_region
      _
    $region9: #{cnn2d_forward.5} parent=1 // pred_fallthru
      _
    // Predicated region
    $region10: #{cnn2d_forward.5} parent=1 // pred_check
      _
    $region11: #{cnn2d_forward.5} parent=1 // pred_check_branch
      %16 = sbr.rel (0) target = $region13
    $region12: #{cnn2d_forward.5} parent=1 // pred_region
      _
    $region13: #{cnn2d_forward.5} parent=1 // pred_fallthru
      _
    // Predicated region
    $region14: #{cnn2d_forward.5} parent=1 // pred_check
      _
    $region15: #{cnn2d_forward.5} parent=1 // pred_check_branch
      %18 = sbr.rel (0) target = $region17
    $region16: #{cnn2d_forward.5} parent=1 // pred_region
      _
    $region17: #{cnn2d_forward.5} parent=1 // pred_fallthru
      _
    // Predicated region
    $region18: #{cnn2d_forward.5} parent=1 // pred_check
      _
    $region19: #{cnn2d_forward.5} parent=1 // pred_check_branch
      %20 = sbr.rel (0) target = $region21
    $region20: #{cnn2d_forward.5} parent=1 // pred_region
      _
    $region21: #{cnn2d_forward.5} parent=1 // pred_fallthru
      _
    %v22 = vld [vmem:[%s0] sm:$0xff]
    %24 = vst [vmem:[#allocation1] ss:$4 sm:$0xff] %v22
    %v25 = vld.sshfl [vmem:[#allocation1] sm:$0xff pattern:$0x73625140]
    %v26 = vld.sshfl [vmem:[#allocation1 + $0x8] sm:$0xff pattern:$0x73625140]
    %v27 = vld.sshfl [vmem:[#allocation1 + $0x10] sm:$0xff pattern:$0x73625140]
    %v28 = vld.sshfl [vmem:[#allocation1 + $0x18] sm:$0xff pattern:$0x73625140]
    %v33 = vpack.c.bf16 %v25, %v25
    %v34 = vpack.c.bf16 %v26, %v26
    %v35 = vpack.c.bf16 %v27, %v27
    %v36 = vpack.c.bf16 %v28, %v28
    %v37 = vld [vmem:[%s1] sm:$0xf]
    %v38 = vld [vmem:[%s1 + $0x4] sm:$0xf]
    %v39 = vld [vmem:[%s1 + $0x8] sm:$0xf]
    %v40 = vld [vmem:[%s1 + $0xc] sm:$0xf]
    %v41 = vld [vmem:[%s1 + $0x10] sm:$0xf]
    %v42 = vld [vmem:[%s1 + $0x14] sm:$0xf]
    %v43 = vld [vmem:[%s1 + $0x18] sm:$0xf]
    %v44 = vld [vmem:[%s1 + $0x1c] sm:$0xf]
    %v45 = vld [vmem:[%s1 + $0x20] sm:$0xf]
    %v46 = vld [vmem:[%s1 + $0x24] sm:$0xf]
    %v47 = vld [vmem:[%s1 + $0x28] sm:$0xf]
    %v48 = vld [vmem:[%s1 + $0x2c] sm:$0xf]
    %v49 = vld [vmem:[%s1 + $0x30] sm:$0xf]
    %v50 = vld [vmem:[%s1 + $0x34] sm:$0xf]
    %v51 = vld [vmem:[%s1 + $0x38] sm:$0xf]
    %v52 = vld [vmem:[%s1 + $0x3c] sm:$0xf]
    %v53 = vld [vmem:[%s1 + $0x40] sm:$0xf]
    %v54 = vld [vmem:[%s1 + $0x44] sm:$0xf]
    %v55 = vld [vmem:[%s1 + $0x48] sm:$0xf]
    %v56 = vld [vmem:[%s1 + $0x4c] sm:$0xf]
    %v57 = vld [vmem:[%s1 + $0x50] sm:$0xf]
    %v58 = vld [vmem:[%s1 + $0x54] sm:$0xf]
    %v59 = vld [vmem:[%s1 + $0x58] sm:$0xf]
    %v60 = vld [vmem:[%s1 + $0x5c] sm:$0xf]
    %v61 = vld [vmem:[%s1 + $0x60] sm:$0xf]
    %v62 = vld [vmem:[%s1 + $0x64] sm:$0xf]
    %v63 = vld [vmem:[%s1 + $0x68] sm:$0xf]
    %v64 = vld [vmem:[%s1 + $0x6c] sm:$0xf]
    %v65 = vld [vmem:[%s1 + $0x70] sm:$0xf]
    %v66 = vld [vmem:[%s1 + $0x74] sm:$0xf]
    %v67 = vld [vmem:[%s1 + $0x78] sm:$0xf]
    %v68 = vld [vmem:[%s1 + $0x7c] sm:$0xf]
    %v69 = vld [vmem:[%s1 + $0x80] sm:$0xf]
    %v70 = vld [vmem:[%s1 + $0x84] sm:$0xf]
    %v71 = vld [vmem:[%s1 + $0x88] sm:$0xf]
    %v72 = vld [vmem:[%s1 + $0x8c] sm:$0xf]
    %v73 = vld [vmem:[%s1 + $0x90] sm:$0xf]
    %v74 = vld [vmem:[%s1 + $0x94] sm:$0xf]
    %v75 = vld [vmem:[%s1 + $0x98] sm:$0xf]
    %v76 = vld [vmem:[%s1 + $0x9c] sm:$0xf]
    %v77 = vld [vmem:[%s1 + $0xa0] sm:$0xf]
    %v78 = vld [vmem:[%s1 + $0xa4] sm:$0xf]
    %v79 = vld [vmem:[%s1 + $0xa8] sm:$0xf]
    %v80 = vld [vmem:[%s1 + $0xac] sm:$0xf]
    %v81 = vld [vmem:[%s1 + $0xb0] sm:$0xf]
    %v82 = vld [vmem:[%s1 + $0xb4] sm:$0xf]
    %v83 = vld [vmem:[%s1 + $0xb8] sm:$0xf]
    %v84 = vld [vmem:[%s1 + $0xbc] sm:$0xf]
    %v85 = vld [vmem:[%s1 + $0xc0] sm:$0xf]
    %v86 = vld [vmem:[%s1 + $0xc4] sm:$0xf]
    %v87 = vld [vmem:[%s1 + $0xc8] sm:$0xf]
    %v88 = vld [vmem:[%s1 + $0xcc] sm:$0xf]
    %v89 = vld [vmem:[%s1 + $0xd0] sm:$0xf]
    %v90 = vld [vmem:[%s1 + $0xd4] sm:$0xf]
    %v91 = vld [vmem:[%s1 + $0xd8] sm:$0xf]
    %v92 = vld [vmem:[%s1 + $0xdc] sm:$0xf]
    %v93 = vld [vmem:[%s1 + $0xe0] sm:$0xf]
    %v94 = vld [vmem:[%s1 + $0xe4] sm:$0xf]
    %v95 = vld [vmem:[%s1 + $0xe8] sm:$0xf]
    %v96 = vld [vmem:[%s1 + $0xec] sm:$0xf]
    %v97 = vld [vmem:[%s1 + $0xf0] sm:$0xf]
    %v98 = vld [vmem:[%s1 + $0xf4] sm:$0xf]
    %v99 = vld [vmem:[%s1 + $0xf8] sm:$0xf]
    %v100 = vld [vmem:[%s1 + $0xfc] sm:$0xf]
    %v101 = vld [vmem:[%s2] sm:$0x1]
    %v103 = vperm.slane %v101, 0
    %v169 = vunpack.c.l.b16 %v37
    %v170 = vunpack.c.l.b16 %v38
    %v171 = vunpack.c.l.b16 %v39
    %v172 = vunpack.c.l.b16 %v40
    %v173 = vunpack.c.l.b16 %v41
    %v174 = vunpack.c.l.b16 %v42
    %v175 = vunpack.c.l.b16 %v43
    %v176 = vunpack.c.l.b16 %v44
    %v177 = vunpack.c.l.b16 %v45
    %v178 = vunpack.c.l.b16 %v46
    %v179 = vunpack.c.l.b16 %v47
    %v180 = vunpack.c.l.b16 %v48
    %v181 = vunpack.c.l.b16 %v49
    %v182 = vunpack.c.l.b16 %v50
    %v183 = vunpack.c.l.b16 %v51
    %v184 = vunpack.c.l.b16 %v52
    %v185 = vunpack.c.l.b16 %v53
    %v186 = vunpack.c.l.b16 %v54
    %v187 = vunpack.c.l.b16 %v55
    %v188 = vunpack.c.l.b16 %v56
    %v189 = vunpack.c.l.b16 %v57
    %v190 = vunpack.c.l.b16 %v58
    %v191 = vunpack.c.l.b16 %v59
    %v192 = vunpack.c.l.b16 %v60
    %v193 = vunpack.c.l.b16 %v61
    %v194 = vunpack.c.l.b16 %v62
    %v195 = vunpack.c.l.b16 %v63
    %v196 = vunpack.c.l.b16 %v64
    %v197 = vunpack.c.l.b16 %v65
    %v198 = vunpack.c.l.b16 %v66
    %v199 = vunpack.c.l.b16 %v67
    %v200 = vunpack.c.l.b16 %v68
    %v201 = vunpack.c.l.b16 %v69
    %v202 = vunpack.c.l.b16 %v70
    %v203 = vunpack.c.l.b16 %v71
    %v204 = vunpack.c.l.b16 %v72
    %v205 = vunpack.c.l.b16 %v73
    %v206 = vunpack.c.l.b16 %v74
    %v207 = vunpack.c.l.b16 %v75
    %v208 = vunpack.c.l.b16 %v76
    %v209 = vunpack.c.l.b16 %v77
    %v210 = vunpack.c.l.b16 %v78
    %v211 = vunpack.c.l.b16 %v79
    %v212 = vunpack.c.l.b16 %v80
    %v213 = vunpack.c.l.b16 %v81
    %v214 = vunpack.c.l.b16 %v82
    %v215 = vunpack.c.l.b16 %v83
    %v216 = vunpack.c.l.b16 %v84
    %v217 = vunpack.c.l.b16 %v85
    %v218 = vunpack.c.l.b16 %v86
    %v219 = vunpack.c.l.b16 %v87
    %v220 = vunpack.c.l.b16 %v88
    %v221 = vunpack.c.l.b16 %v89
    %v222 = vunpack.c.l.b16 %v90
    %v223 = vunpack.c.l.b16 %v91
    %v224 = vunpack.c.l.b16 %v92
    %v225 = vunpack.c.l.b16 %v93
    %v226 = vunpack.c.l.b16 %v94
    %v227 = vunpack.c.l.b16 %v95
    %v228 = vunpack.c.l.b16 %v96
    %v229 = vunpack.c.l.b16 %v97
    %v230 = vunpack.c.l.b16 %v98
    %v231 = vunpack.c.l.b16 %v99
    %v232 = vunpack.c.l.b16 %v100
    %v233 = vpack.c.b16 %v170, %v169
    %v234 = vpack.c.b16 %v172, %v171
    %v235 = vpack.c.b16 %v174, %v173
    %v236 = vpack.c.b16 %v176, %v175
    %v237 = vpack.c.b16 %v178, %v177
    %v238 = vpack.c.b16 %v180, %v179
    %v239 = vpack.c.b16 %v182, %v181
    %v240 = vpack.c.b16 %v184, %v183
    %v241 = vpack.c.b16 %v186, %v185
    %v242 = vpack.c.b16 %v188, %v187
    %v243 = vpack.c.b16 %v190, %v189
    %v244 = vpack.c.b16 %v192, %v191
    %v245 = vpack.c.b16 %v194, %v193
    %v246 = vpack.c.b16 %v196, %v195
    %v247 = vpack.c.b16 %v198, %v197
    %v248 = vpack.c.b16 %v200, %v199
    %v249 = vpack.c.b16 %v202, %v201
    %v250 = vpack.c.b16 %v204, %v203
    %v251 = vpack.c.b16 %v206, %v205
    %v252 = vpack.c.b16 %v208, %v207
    %v253 = vpack.c.b16 %v210, %v209
    %v254 = vpack.c.b16 %v212, %v211
    %v255 = vpack.c.b16 %v214, %v213
    %v256 = vpack.c.b16 %v216, %v215
    %v257 = vpack.c.b16 %v218, %v217
    %v258 = vpack.c.b16 %v220, %v219
    %v259 = vpack.c.b16 %v222, %v221
    %v260 = vpack.c.b16 %v224, %v223
    %v261 = vpack.c.b16 %v226, %v225
    %v262 = vpack.c.b16 %v228, %v227
    %v263 = vpack.c.b16 %v230, %v229
    %v264 = vpack.c.b16 %v232, %v231
    %297 = vmatpush.bf16.msra.mxu0 %v240
    %298 = vmatpush.bf16.msra.mxu0 %v239
    %299 = vmatpush.bf16.msra.mxu0 %v238
    %300 = vmatpush.bf16.msra.mxu0 %v237
    %301 = vmatpush.bf16.msra.mxu0 %v236
    %302 = vmatpush.bf16.msra.mxu0 %v235
    %303 = vmatpush.bf16.msra.mxu0 %v234
    %304 = vmatpush.bf16.msra.mxu0 %v233
    %305 = vmatmul.bf16.gmra.mxu0 %v33
    %v306 = vpop.f32.mrf.mxu0
    %v307 = vadd.f32 %v103, %v306
    %v308 = vpop.f32.mrf.mxu0
    %309 = vdwg.mxu0
    %310 = vmatpush.bf16.msra.mxu0 %v248
    %311 = vmatpush.bf16.msra.mxu0 %v247
    %312 = vmatpush.bf16.msra.mxu0 %v246
    %313 = vmatpush.bf16.msra.mxu0 %v245
    %314 = vmatpush.bf16.msra.mxu0 %v244
    %315 = vmatpush.bf16.msra.mxu0 %v243
    %316 = vmatpush.bf16.msra.mxu0 %v242
    %317 = vmatpush.bf16.msra.mxu0 %v241
    %318 = vmatmul.bf16.gmra.mxu0 %v34
    %v319 = vpop.f32.mrf.mxu0
    %v320 = vadd.f32 %v307, %v319
    %v321 = vpop.f32.mrf.mxu0
    %322 = vdwg.mxu0
    %323 = vmatpush.bf16.msra.mxu0 %v256
    %324 = vmatpush.bf16.msra.mxu0 %v255
    %325 = vmatpush.bf16.msra.mxu0 %v254
    %326 = vmatpush.bf16.msra.mxu0 %v253
    %327 = vmatpush.bf16.msra.mxu0 %v252
    %328 = vmatpush.bf16.msra.mxu0 %v251
    %329 = vmatpush.bf16.msra.mxu0 %v250
    %330 = vmatpush.bf16.msra.mxu0 %v249
    %331 = vmatmul.bf16.gmra.mxu0 %v35
    %v332 = vpop.f32.mrf.mxu0
    %v333 = vadd.f32 %v320, %v332
    %v334 = vpop.f32.mrf.mxu0
    %335 = vdwg.mxu0
    %336 = vmatpush.bf16.msra.mxu0 %v264
    %337 = vmatpush.bf16.msra.mxu0 %v263
    %338 = vmatpush.bf16.msra.mxu0 %v262
    %339 = vmatpush.bf16.msra.mxu0 %v261
    %340 = vmatpush.bf16.msra.mxu0 %v260
    %341 = vmatpush.bf16.msra.mxu0 %v259
    %342 = vmatpush.bf16.msra.mxu0 %v258
    %343 = vmatpush.bf16.msra.mxu0 %v257
    %344 = vmatmul.bf16.gmra.mxu0 %v36
    %v345 = vpop.f32.mrf.mxu0
    %v346 = vadd.f32 %v333, %v345
    %v347 = vpop.f32.mrf.mxu0
    %348 = vdwg.mxu0
    %v349 = vmax.f32 %v346, 0.0
    %v350 = vpack.c.bf16 %v349, %v349
    %v351 = vld [vmem:[%s3] sm:$0xf]
    %v352 = vld [vmem:[%s3 + $0x4] sm:$0xf]
    %v353 = vld [vmem:[%s3 + $0x8] sm:$0xf]
    %v354 = vld [vmem:[%s3 + $0xc] sm:$0xf]
    %v355 = vld [vmem:[%s4] sm:$0x1]
    %v357 = vperm.slane %v355, 0
    %v363 = vunpack.c.l.b16 %v351
    %v364 = vunpack.c.l.b16 %v352
    %v365 = vunpack.c.l.b16 %v353
    %v366 = vunpack.c.l.b16 %v354
    %v367 = vpack.c.b16 %v364, %v363
    %v368 = vpack.c.b16 %v366, %v365
    %vm371 = vcmask 261120
    %v373 = vsel %vm371, %v350, 0
    %375 = vmatpush.bf16.msra.mxu0 0
    %376 = vmatpush.bf16.msra.mxu0 0
    %377 = vmatpush.bf16.msra.mxu0 0
    %378 = vmatpush.bf16.msra.mxu0 0
    %379 = vmatpush.bf16.msra.mxu0 0
    %380 = vmatpush.bf16.msra.mxu0 0
    %381 = vmatpush.bf16.msra.mxu0 %v368
    %382 = vmatpush.bf16.msra.mxu0 %v367
    %383 = vmatmul.bf16.gmra.mxu0 %v373
    %v384 = vpop.f32.mrf.mxu0
    %v385 = vadd.f32 %v357, %v384
    %v386 = vpop.f32.mrf.mxu0
    %387 = vdwg.mxu0
    %vm388 = vcmask 33792
    %389 = vst.msk [vmem:[#allocation2] sm:$0x3] %vm388, %v385
    // Predicated region
    $region22: #{cnn2d_forward.5} parent=1 // pred_check
      _
    $region23: #{cnn2d_forward.5} parent=1 // pred_check_branch
      %391 = sbr.rel (0) target = $region25
    $region24: #{cnn2d_forward.5} parent=1 // pred_region
      %393 = vsyncadd [#allocation3], 0
      %s395 = sshll.u32 [#allocation2], 4
      %s396 = int_to_ptr.vmem [resolvable:$true] %s395
      %s397 = sshll.u32 %s5, 4
      %s398 = int_to_ptr.hbm [resolvable:$true] %s397
      %400 = dma.vmem_to_hbm [thread:$0]  %s396, 32, %s398, [#allocation3]
    $region25: #{cnn2d_forward.5} parent=1 // pred_fallthru
      _
    // Predicated region
    $region26: #{cnn2d_forward.5} parent=1 // pred_check
      _
    $region27: #{cnn2d_forward.5} parent=1 // pred_check_branch
      %402 = sbr.rel (0) target = $region29
    $region28: #{cnn2d_forward.5} parent=1 // pred_region
      %404 = dma.done [#allocation3], 32
    $region29: #{cnn2d_forward.5} parent=1 // pred_fallthru
      _
    %405 = vsyncpa [#allocation3], 1

// kernel: cnn2d_forward.4
$region0: #{cnn2d_forward.4}
  #allocation0 [shape = 'u32[]', space=smem, size = 0x4, offset = 0x4, fixed_abs, tag = 'smem constant byte address 0x4 - core index']
  #allocation1 [shape = 'u32[72,128]{1,0:T(1,128)}', space=vmem, size = 0x9000, scoped, tag = 'internal scratch']
  %s0 = inlined_call_operand.vmem [shape: f32[2,8,162], index: 0, kind: input, shape index: {}]
  %s1 = inlined_call_operand.vmem [shape: bf16[9,8,8], index: 1, kind: input, shape index: {}]
  %s2 = inlined_call_operand.vmem [shape: f32[8,1], index: 2, kind: input, shape index: {}]
  %s3 = inlined_call_operand.vmem [shape: f32[9,128], index: 3, kind: input, shape index: {}]
  %s4 = inlined_call_operand.vmem [shape: f32[112,64], index: 4, kind: input, shape index: {}]
  %s5 = inlined_call_operand.vmem [shape: f32[2,8,64], index: 5, kind: output, shape index: {}]
  %s6 = sld [smem:[#allocation0]]
  $region53: #{cnn2d_forward.4} parent=0
    _
  %s8 = ssub.s32 1, %s6
  %s9 = scalar_select 0, %s8, %s6
  loop: start=0, step=1, limit=4
  $region2: #{cnn2d_forward.4} parent=0 // loop_pre_header
    _
  $region3: #{cnn2d_forward.4} parent=0 // loop_header
    %s11 = sphi 0, %s15
    %p12 = scmp.ge.s32.totalorder %s11, 4
    %s21 = sphi 0, %s23
    %s24 = sphi 0, %s21
    %s25 = sphi 0, %s24
    %s41 = sphi 0, %s25
    %s45 = sphi 0, %s45
    %s47 = sphi 0, %s45
    %s48 = sphi 0, %s47
    %s62 = sphi 0, %s48
    %s66 = sphi 0, %s66
    %s68 = sphi 0, %s66
    %s69 = sphi 0, %s68
    %s83 = sphi 0, %s69
    %s87 = sphi 0, %s87
    %s89 = sphi 0, %s87
    %s90 = sphi 0, %s89
    %s104 = sphi 0, %s90
    %s108 = sphi 0, %s108
    %s110 = sphi 0, %s108
    %s111 = sphi 0, %s110
    %s125 = sphi 0, %s111
    %s131 = sphi 0, %s133
    %s134 = sphi 0, %s131
    %s135 = sphi 0, %s134
    %s151 = sphi 0, %s135
  $region4: #{cnn2d_forward.4} parent=0 // loop_header_branch
    %14 = sbr.rel (%p12) target = $region8
  $region5: #{cnn2d_forward.4} parent=0 // loop_body
    %s16 = ssub.s32 %s11, 1
    %s17 = ssub.s32 %s11, 2
    %s18 = sadd.s32 %s11, 1
    %s19 = ssub.s32 %s11, %s18
    %p20 = scmp.eq.s32.totalorder %s19, 0
    %s22 = sadd.s32 %s21, 1
    %s23 = scalar_select %p20, %s21, %s22
    %p26 = pneg %p20
    %p27 = scmp.eq.s32.totalorder %s11, 1
    %p28 = por %p26, %p27
    %p29 = scmp.ne.s32.totalorder %s21, %s24
    %p30 = scmp.eq.s32.totalorder %s11, 0
    %p31 = por %p29, %p30
    %p32 = scmp.ne.s32.totalorder %s21, %s24
    %p33 = scmp.eq.s32.totalorder %s16, 1
    %p34 = por %p32, %p33
    %p35 = scmp.ne.s32.totalorder %s24, %s25
    %p36 = scmp.eq.s32.totalorder %s16, 0
    %p37 = por %p35, %p36
    %p38 = scmp.ne.s32.totalorder %s24, %s25
    %p39 = scmp.eq.s32.totalorder %s17, 1
    %p40 = por %p38, %p39
    %p42 = scmp.ne.s32.totalorder %s25, %s41
    %p43 = scmp.eq.s32.totalorder %s17, 0
    %p44 = por %p42, %p43
    %s46 = sadd.s32 %s45, 1
    %p49 = scmp.eq.s32.totalorder %s11, 1
    %p50 = scmp.ne.s32.totalorder %s45, %s47
    %p51 = scmp.eq.s32.totalorder %s11, 0
    %p52 = por %p50, %p51
    %p53 = scmp.ne.s32.totalorder %s45, %s47
    %p54 = scmp.eq.s32.totalorder %s16, 1
    %p55 = por %p53, %p54
    %p56 = scmp.ne.s32.totalorder %s47, %s48
    %p57 = scmp.eq.s32.totalorder %s16, 0
    %p58 = por %p56, %p57
    %p59 = scmp.ne.s32.totalorder %s47, %s48
    %p60 = scmp.eq.s32.totalorder %s17, 1
    %p61 = por %p59, %p60
    %p63 = scmp.ne.s32.totalorder %s48, %s62
    %p64 = scmp.eq.s32.totalorder %s17, 0
    %p65 = por %p63, %p64
    %s67 = sadd.s32 %s66, 1
    %p70 = scmp.eq.s32.totalorder %s11, 1
    %p71 = scmp.ne.s32.totalorder %s66, %s68
    %p72 = scmp.eq.s32.totalorder %s11, 0
    %p73 = por %p71, %p72
    %p74 = scmp.ne.s32.totalorder %s66, %s68
    %p75 = scmp.eq.s32.totalorder %s16, 1
    %p76 = por %p74, %p75
    %p77 = scmp.ne.s32.totalorder %s68, %s69
    %p78 = scmp.eq.s32.totalorder %s16, 0
    %p79 = por %p77, %p78
    %p80 = scmp.ne.s32.totalorder %s68, %s69
    %p81 = scmp.eq.s32.totalorder %s17, 1
    %p82 = por %p80, %p81
    %p84 = scmp.ne.s32.totalorder %s69, %s83
    %p85 = scmp.eq.s32.totalorder %s17, 0
    %p86 = por %p84, %p85
    %s88 = sadd.s32 %s87, 1
    %p91 = scmp.eq.s32.totalorder %s11, 1
    %p92 = scmp.ne.s32.totalorder %s87, %s89
    %p93 = scmp.eq.s32.totalorder %s11, 0
    %p94 = por %p92, %p93
    %p95 = scmp.ne.s32.totalorder %s87, %s89
    %p96 = scmp.eq.s32.totalorder %s16, 1
    %p97 = por %p95, %p96
    %p98 = scmp.ne.s32.totalorder %s89, %s90
    %p99 = scmp.eq.s32.totalorder %s16, 0
    %p100 = por %p98, %p99
    %p101 = scmp.ne.s32.totalorder %s89, %s90
    %p102 = scmp.eq.s32.totalorder %s17, 1
    %p103 = por %p101, %p102
    %p105 = scmp.ne.s32.totalorder %s90, %s104
    %p106 = scmp.eq.s32.totalorder %s17, 0
    %p107 = por %p105, %p106
    %s109 = sadd.s32 %s108, 1
    %p112 = scmp.eq.s32.totalorder %s11, 1
    %p113 = scmp.ne.s32.totalorder %s108, %s110
    %p114 = scmp.eq.s32.totalorder %s11, 0
    %p115 = por %p113, %p114
    %p116 = scmp.ne.s32.totalorder %s108, %s110
    %p117 = scmp.eq.s32.totalorder %s16, 1
    %p118 = por %p116, %p117
    %p119 = scmp.ne.s32.totalorder %s110, %s111
    %p120 = scmp.eq.s32.totalorder %s16, 0
    %p121 = por %p119, %p120
    %p122 = scmp.ne.s32.totalorder %s110, %s111
    %p123 = scmp.eq.s32.totalorder %s17, 1
    %p124 = por %p122, %p123
    %p126 = scmp.ne.s32.totalorder %s111, %s125
    %p127 = scmp.eq.s32.totalorder %s17, 0
    %p128 = por %p126, %p127
    %s129 = ssub.s32 %s11, %s18
    %p130 = scmp.eq.s32.totalorder %s129, 0
    %s132 = sadd.s32 %s131, 1
    %s133 = scalar_select %p130, %s131, %s132
    %p136 = pneg %p130
    %p137 = scmp.eq.s32.totalorder %s11, 1
    %p138 = por %p136, %p137
    %p139 = scmp.ne.s32.totalorder %s131, %s134
    %p140 = scmp.eq.s32.totalorder %s11, 0
    %p141 = por %p139, %p140
    %p142 = scmp.ne.s32.totalorder %s131, %s134
    %p143 = scmp.eq.s32.totalorder %s16, 1
    %p144 = por %p142, %p143
    %p145 = scmp.ne.s32.totalorder %s134, %s135
    %p146 = scmp.eq.s32.totalorder %s16, 0
    %p147 = por %p145, %p146
    %p148 = scmp.ne.s32.totalorder %s134, %s135
    %p149 = scmp.eq.s32.totalorder %s17, 1
    %p150 = por %p148, %p149
    %p152 = scmp.ne.s32.totalorder %s135, %s151
    %p153 = scmp.eq.s32.totalorder %s17, 0
    %p154 = por %p152, %p153
    %p155 = scmp.le.s32.totalorder 1, %s11
    %p156 = scmp.lt.s32.totalorder %s11, 3
    %p157 = pnand %p155, %p156
    %p158 = pneg %p157
    // Predicated region
    $region9: #{cnn2d_forward.4} parent=5 // pred_check
      _
    $region10: #{cnn2d_forward.4} parent=5 // pred_check_branch
      %160 = sbr.rel (%p157) target = $region12
    $region11: #{cnn2d_forward.4} parent=5 // pred_region
      %s161 = ssub.s32 %s11, 1
      // Predicated region
      $region13: #{cnn2d_forward.4} parent=11 // pred_check
        %p162 = pneg %p58
      $region14: #{cnn2d_forward.4} parent=11 // pred_check_branch
        %164 = sbr.rel (%p162) target = $region16
      $region15: #{cnn2d_forward.4} parent=11 // pred_region
        _
      $region16: #{cnn2d_forward.4} parent=11 // pred_fallthru
        _
      // Predicated region
      $region17: #{cnn2d_forward.4} parent=11 // pred_check
        %p165 = pneg %p79
      $region18: #{cnn2d_forward.4} parent=11 // pred_check_branch
        %167 = sbr.rel (%p165) target = $region20
      $region19: #{cnn2d_forward.4} parent=11 // pred_region
        _
      $region20: #{cnn2d_forward.4} parent=11 // pred_fallthru
        _
      // Predicated region
      $region21: #{cnn2d_forward.4} parent=11 // pred_check
        %p168 = pneg %p100
      $region22: #{cnn2d_forward.4} parent=11 // pred_check_branch
        %170 = sbr.rel (%p168) target = $region24
      $region23: #{cnn2d_forward.4} parent=11 // pred_region
        _
      $region24: #{cnn2d_forward.4} parent=11 // pred_fallthru
        _
      // Predicated region
      $region25: #{cnn2d_forward.4} parent=11 // pred_check
        %p171 = pneg %p121
      $region26: #{cnn2d_forward.4} parent=11 // pred_check_branch
        %173 = sbr.rel (%p171) target = $region28
      $region27: #{cnn2d_forward.4} parent=11 // pred_region
        _
      $region28: #{cnn2d_forward.4} parent=11 // pred_fallthru
        _
    $region12: #{cnn2d_forward.4} parent=5 // pred_fallthru
      _
    %p174 = scmp.lt.s32.totalorder %s11, 2
    // Predicated region
    $region29: #{cnn2d_forward.4} parent=5 // pred_check
      %p175 = pneg %p174
    $region30: #{cnn2d_forward.4} parent=5 // pred_check_branch
      %177 = sbr.rel (%p175) target = $region32
    $region31: #{cnn2d_forward.4} parent=5 // pred_region
      // Predicated region
      $region33: #{cnn2d_forward.4} parent=31 // pred_check
        %p178 = pneg %p31
      $region34: #{cnn2d_forward.4} parent=31 // pred_check_branch
        %180 = sbr.rel (%p178) target = $region36
      $region35: #{cnn2d_forward.4} parent=31 // pred_region
        %p181 = scmp.lt.s32.totalorder %s11, 1
        %s182 = scalar_select %p181, %s11, 1
        %s183 = smul.addr %s182, 2
        %s184 = smul.addr %s183, 8
        %s185 = scalar_lea.vmem %s0, %s184
      $region36: #{cnn2d_forward.4} parent=31 // pred_fallthru
        _
    $region32: #{cnn2d_forward.4} parent=5 // pred_fallthru
      _
    %p186 = scmp.le.s32.totalorder 1, %s11
    %p187 = scmp.lt.s32.totalorder %s11, 3
    %p188 = pnand %p186, %p187
    %p189 = pneg %p188
    // Predicated region
    $region37: #{cnn2d_forward.4} parent=5 // pred_check
      _
    $region38: #{cnn2d_forward.4} parent=5 // pred_check_branch
      %191 = sbr.rel (%p188) target = $region40
    $region39: #{cnn2d_forward.4} parent=5 // pred_region
      %s192 = ssub.s32 %s11, 1
      %p193 = scmp.lt.s32.totalorder %s16, 1
      %s194 = scalar_select %p193, %s16, 1
      %s195 = smul.addr %s194, 2
      %s196 = smul.addr %s195, 8
      %s197 = scalar_lea.vmem %s0, %s196
      %p198 = pneg %p37
      %p199 = pneg %p34
      %p200 = pneg %p58
      %p201 = pneg %p55
      %p202 = pneg %p79
      %p203 = pneg %p76
      %p204 = pneg %p100
      %p205 = pneg %p97
      %p206 = pneg %p121
      %p207 = pneg %p118
      %p208 = pneg %p147
      %p209 = pneg %p144
      %p210 = scmp.lt.s32.totalorder %s16, 1
      %s211 = scalar_select %p210, %s16, 1
      %s212 = smul.addr %s211, 8
      %s213 = scalar_lea.vmem %s5, %s212
      %p214 = scmp.lt.s32.totalorder %s16, 1
      %s215 = scalar_select %p214, %s16, 1
      %s216 = smul.addr %s215, 2
      %s217 = smul.addr %s216, 8
      %s218 = scalar_lea.vmem %s0, %s217
      %p219 = scmp.lt.s32.totalorder %s16, 1
      %s220 = scalar_select %p219, %s16, 1
      %s221 = smul.addr %s220, 8
      %s222 = scalar_lea.vmem %s5, %s221
      %v224 = vld [vmem:[%s218] sm:$0xff]
      %v225 = vld [vmem:[%s218 + $0x8] sm:$0xff]
      %v226 = vld [vmem:[%s3] sm:$0xff]
      %v227 = vld [vmem:[%s3 + $0x8] sm:$0x1]
      %v228 = vperm.slane %v226, 0
      %v229 = vmul.f32 %v224, %v228
      %v230 = vld [vmem:[%s1] sm:$0xf]
      %v231 = vpack.c.bf16 %v229, %v229
      %v232 = vperm.slane %v226, 1
      %234 = vrot.lane.b32.xlu0 %v232, 1
      %v235 = vpop.permute.xlu0 %234
      %v237 = vmul.f32 %v224, %v235
      %v238 = vmul.f32 %v225, %v235
      %s239 = scalar_lea.vmem %s1, 4
      %v240 = vld [vmem:[%s239] sm:$0xf]
      %v241 = vpack.c.bf16 %v237, %v237
      %v242 = vpack.c.bf16 %v238, %v238
      %245 = vrot.lane.b32.xlu0 %v241, 127
      %v246 = vpop.permute.xlu0 %245
      %247 = vrot.lane.b32.xlu0 %v242, 127
      %v248 = vpop.permute.xlu0 %247
      %vm249 = vcmask 1039360
      %v250 = vsel %vm249, %v246, %v248
      %vm251 = vcmask 64512
      %v253 = vsel %vm251, %v240, 0
      %vm255 = vcmask 1043456
      %v257 = vsel %vm255, %v250, 0
      %259 = vmatpush.bf16.msra.mxu0 0
      %260 = vmatpush.bf16.msra.mxu0 0
      %261 = vmatpush.bf16.msra.mxu0 0
      %262 = vmatpush.bf16.msra.mxu0 0
      %263 = vmatpush.bf16.msra.mxu0 0
      %264 = vmatpush.bf16.msra.mxu0 0
      %265 = vmatpush.bf16.msra.mxu0 0
      %266 = vmatpush.bf16.msra.mxu0 %v257
      %267 = vmatmul.bf16.gmra.mxu0 %v253
      %v268 = vpop.f32.mrf.mxu0
      %v269 = vadd.f32 0.0, %v268
      %v270 = vpop.f32.mrf.mxu0
      %271 = vdwg.mxu0
      %v273 = vsel %vm251, %v230, 0
      %v276 = vsel %vm255, %v231, 0
      %278 = vmatpush.bf16.msra.mxu0 0
      %279 = vmatpush.bf16.msra.mxu0 0
      %280 = vmatpush.bf16.msra.mxu0 0
      %281 = vmatpush.bf16.msra.mxu0 0
      %282 = vmatpush.bf16.msra.mxu0 0
      %283 = vmatpush.bf16.msra.mxu0 0
      %284 = vmatpush.bf16.msra.mxu0 0
      %285 = vmatpush.bf16.msra.mxu0 %v276
      %286 = vmatmul.bf16.gmra.mxu0 %v273
      %v287 = vpop.f32.mrf.mxu0
      %v288 = vadd.f32 %v269, %v287
      %v289 = vpop.f32.mrf.mxu0
      %290 = vdwg.mxu0
      %v291 = vperm.slane %v226, 2
      %293 = vrot.lane.b32.xlu0 %v291, 2
      %v294 = vpop.permute.xlu0 %293
      %v296 = vmul.f32 %v224, %v294
      %v297 = vmul.f32 %v225, %v294
      %s298 = scalar_lea.vmem %s1, 8
      %v299 = vld [vmem:[%s298] sm:$0xf]
      %v300 = vpack.c.bf16 %v296, %v296
      %v301 = vpack.c.bf16 %v297, %v297
      %304 = vrot.lane.b32.xlu0 %v300, 126
      %v305 = vpop.permute.xlu0 %304
      %306 = vrot.lane.b32.xlu0 %v301, 126
      %v307 = vpop.permute.xlu0 %306
      %vm308 = vcmask 1031168
      %v309 = vsel %vm308, %v305, %v307
      %v311 = vsel %vm251, %v299, 0
      %v314 = vsel %vm255, %v309, 0
      %316 = vmatpush.bf16.msra.mxu0 0
      %317 = vmatpush.bf16.msra.mxu0 0
      %318 = vmatpush.bf16.msra.mxu0 0
      %319 = vmatpush.bf16.msra.mxu0 0
      %320 = vmatpush.bf16.msra.mxu0 0
      %321 = vmatpush.bf16.msra.mxu0 0
      %322 = vmatpush.bf16.msra.mxu0 0
      %323 = vmatpush.bf16.msra.mxu0 %v314
      %324 = vmatmul.bf16.gmra.mxu0 %v311
      %v325 = vpop.f32.mrf.mxu0
      %v326 = vadd.f32 0.0, %v325
      %v327 = vpop.f32.mrf.mxu0
      %328 = vdwg.mxu0
      %v329 = vadd.f32 %v288, %v326
      %v330 = vperm.slane %v226, 3
      %332 = vrot.lane.b32.xlu0 %v330, 16
      %v333 = vpop.permute.xlu0 %332
      %v335 = vmul.f32 %v224, %v333
      %v336 = vmul.f32 %v225, %v333
      %s337 = scalar_lea.vmem %s1, 12
      %v338 = vld [vmem:[%s337] sm:$0xf]
      %v339 = vpack.c.bf16 %v335, %v335
      %v340 = vpack.c.bf16 %v336, %v336
      %343 = vrot.lane.b32.xlu0 %v339, 112
      %v344 = vpop.permute.xlu0 %343
      %345 = vrot.lane.b32.xlu0 %v340, 112
      %v346 = vpop.permute.xlu0 %345
      %vm347 = vcmask 916480
      %v348 = vsel %vm347, %v344, %v346
      %v350 = vsel %vm251, %v338, 0
      %v353 = vsel %vm255, %v348, 0
      %355 = vmatpush.bf16.msra.mxu0 0
      %356 = vmatpush.bf16.msra.mxu0 0
      %357 = vmatpush.bf16.msra.mxu0 0
      %358 = vmatpush.bf16.msra.mxu0 0
      %359 = vmatpush.bf16.msra.mxu0 0
      %360 = vmatpush.bf16.msra.mxu0 0
      %361 = vmatpush.bf16.msra.mxu0 0
      %362 = vmatpush.bf16.msra.mxu0 %v353
      %363 = vmatmul.bf16.gmra.mxu0 %v350
      %v364 = vpop.f32.mrf.mxu0
      %v365 = vadd.f32 0.0, %v364
      %v366 = vpop.f32.mrf.mxu0
      %367 = vdwg.mxu0
      %v368 = vadd.f32 %v329, %v365
      %v369 = vperm.slane %v226, 4
      %371 = vrot.lane.b32.xlu0 %v369, 17
      %v372 = vpop.permute.xlu0 %371
      %v374 = vmul.f32 %v224, %v372
      %v375 = vmul.f32 %v225, %v372
      %s376 = scalar_lea.vmem %s1, 16
      %v377 = vld [vmem:[%s376] sm:$0xf]
      %v378 = vpack.c.bf16 %v374, %v374
      %v379 = vpack.c.bf16 %v375, %v375
      %382 = vrot.lane.b32.xlu0 %v378, 111
      %v383 = vpop.permute.xlu0 %382
      %384 = vrot.lane.b32.xlu0 %v379, 111
      %v385 = vpop.permute.xlu0 %384
      %vm386 = vcmask 908288
      %v387 = vsel %vm386, %v383, %v385
      %v389 = vsel %vm251, %v377, 0
      %v392 = vsel %vm255, %v387, 0
      %394 = vmatpush.bf16.msra.mxu0 0
      %395 = vmatpush.bf16.msra.mxu0 0
      %396 = vmatpush.bf16.msra.mxu0 0
      %397 = vmatpush.bf16.msra.mxu0 0
      %398 = vmatpush.bf16.msra.mxu0 0
      %399 = vmatpush.bf16.msra.mxu0 0
      %400 = vmatpush.bf16.msra.mxu0 0
      %401 = vmatpush.bf16.msra.mxu0 %v392
      %402 = vmatmul.bf16.gmra.mxu0 %v389
      %v403 = vpop.f32.mrf.mxu0
      %v404 = vadd.f32 0.0, %v403
      %v405 = vpop.f32.mrf.mxu0
      %406 = vdwg.mxu0
      %v407 = vadd.f32 %v368, %v404
      %v408 = vperm.slane %v226, 5
      %410 = vrot.lane.b32.xlu0 %v408, 18
      %v411 = vpop.permute.xlu0 %410
      %v413 = vmul.f32 %v224, %v411
      %v414 = vmul.f32 %v225, %v411
      %s415 = scalar_lea.vmem %s1, 20
      %v416 = vld [vmem:[%s415] sm:$0xf]
      %v417 = vpack.c.bf16 %v413, %v413
      %v418 = vpack.c.bf16 %v414, %v414
      %421 = vrot.lane.b32.xlu0 %v417, 110
      %v422 = vpop.permute.xlu0 %421
      %423 = vrot.lane.b32.xlu0 %v418, 110
      %v424 = vpop.permute.xlu0 %423
      %vm425 = vcmask 900096
      %v426 = vsel %vm425, %v422, %v424
      %v428 = vsel %vm251, %v416, 0
      %v431 = vsel %vm255, %v426, 0
      %433 = vmatpush.bf16.msra.mxu0 0
      %434 = vmatpush.bf16.msra.mxu0 0
      %435 = vmatpush.bf16.msra.mxu0 0
      %436 = vmatpush.bf16.msra.mxu0 0
      %437 = vmatpush.bf16.msra.mxu0 0
      %438 = vmatpush.bf16.msra.mxu0 0
      %439 = vmatpush.bf16.msra.mxu0 0
      %440 = vmatpush.bf16.msra.mxu0 %v431
      %441 = vmatmul.bf16.gmra.mxu0 %v428
      %v442 = vpop.f32.mrf.mxu0
      %v443 = vadd.f32 0.0, %v442
      %v444 = vpop.f32.mrf.mxu0
      %445 = vdwg.mxu0
      %v446 = vadd.f32 %v407, %v443
      %v447 = vperm.slane %v226, 6
      %449 = vrot.lane.b32.xlu0 %v447, 32
      %v450 = vpop.permute.xlu0 %449
      %v452 = vmul.f32 %v224, %v450
      %v453 = vmul.f32 %v225, %v450
      %s454 = scalar_lea.vmem %s1, 24
      %v455 = vld [vmem:[%s454] sm:$0xf]
      %v456 = vpack.c.bf16 %v452, %v452
      %v457 = vpack.c.bf16 %v453, %v453
      %460 = vrot.lane.b32.xlu0 %v456, 96
      %v461 = vpop.permute.xlu0 %460
      %462 = vrot.lane.b32.xlu0 %v457, 96
      %v463 = vpop.permute.xlu0 %462
      %vm464 = vcmask 785408
      %v465 = vsel %vm464, %v461, %v463
      %v467 = vsel %vm251, %v455, 0
      %v470 = vsel %vm255, %v465, 0
      %472 = vmatpush.bf16.msra.mxu0 0
      %473 = vmatpush.bf16.msra.mxu0 0
      %474 = vmatpush.bf16.msra.mxu0 0
      %475 = vmatpush.bf16.msra.mxu0 0
      %476 = vmatpush.bf16.msra.mxu0 0
      %477 = vmatpush.bf16.msra.mxu0 0
      %478 = vmatpush.bf16.msra.mxu0 0
      %479 = vmatpush.bf16.msra.mxu0 %v470
      %480 = vmatmul.bf16.gmra.mxu0 %v467
      %v481 = vpop.f32.mrf.mxu0
      %v482 = vadd.f32 0.0, %v481
      %v483 = vpop.f32.mrf.mxu0
      %484 = vdwg.mxu0
      %v485 = vadd.f32 %v446, %v482
      %v486 = vperm.slane %v226, 7
      %488 = vrot.lane.b32.xlu0 %v486, 33
      %v489 = vpop.permute.xlu0 %488
      %v491 = vmul.f32 %v224, %v489
      %v492 = vmul.f32 %v225, %v489
      %s493 = scalar_lea.vmem %s1, 28
      %v494 = vld [vmem:[%s493] sm:$0xf]
      %v495 = vpack.c.bf16 %v491, %v491
      %v496 = vpack.c.bf16 %v492, %v492
      %499 = vrot.lane.b32.xlu0 %v495, 95
      %v500 = vpop.permute.xlu0 %499
      %501 = vrot.lane.b32.xlu0 %v496, 95
      %v502 = vpop.permute.xlu0 %501
      %vm503 = vcmask 777216
      %v504 = vsel %vm503, %v500, %v502
      %v506 = vsel %vm251, %v494, 0
      %v509 = vsel %vm255, %v504, 0
      %511 = vmatpush.bf16.msra.mxu0 0
      %512 = vmatpush.bf16.msra.mxu0 0
      %513 = vmatpush.bf16.msra.mxu0 0
      %514 = vmatpush.bf16.msra.mxu0 0
      %515 = vmatpush.bf16.msra.mxu0 0
      %516 = vmatpush.bf16.msra.mxu0 0
      %517 = vmatpush.bf16.msra.mxu0 0
      %518 = vmatpush.bf16.msra.mxu0 %v509
      %519 = vmatmul.bf16.gmra.mxu0 %v506
      %v520 = vpop.f32.mrf.mxu0
      %v521 = vadd.f32 0.0, %v520
      %v522 = vpop.f32.mrf.mxu0
      %523 = vdwg.mxu0
      %v524 = vadd.f32 %v485, %v521
      %v525 = vperm.slane %v227, 0
      %527 = vrot.lane.b32.xlu0 %v525, 34
      %v528 = vpop.permute.xlu0 %527
      %v530 = vmul.f32 %v224, %v528
      %v531 = vmul.f32 %v225, %v528
      %s532 = scalar_lea.vmem %s1, 32
      %v533 = vld [vmem:[%s532] sm:$0xf]
      %v534 = vpack.c.bf16 %v530, %v530
      %v535 = vpack.c.bf16 %v531, %v531
      %538 = vrot.lane.b32.xlu0 %v534, 94
      %v539 = vpop.permute.xlu0 %538
      %540 = vrot.lane.b32.xlu0 %v535, 94
      %v541 = vpop.permute.xlu0 %540
      %vm542 = vcmask 769024
      %v543 = vsel %vm542, %v539, %v541
      %v545 = vsel %vm251, %v533, 0
      %v548 = vsel %vm255, %v543, 0
      %550 = vmatpush.bf16.msra.mxu0 0
      %551 = vmatpush.bf16.msra.mxu0 0
      %552 = vmatpush.bf16.msra.mxu0 0
      %553 = vmatpush.bf16.msra.mxu0 0
      %554 = vmatpush.bf16.msra.mxu0 0
      %555 = vmatpush.bf16.msra.mxu0 0
      %556 = vmatpush.bf16.msra.mxu0 0
      %557 = vmatpush.bf16.msra.mxu0 %v548
      %558 = vmatmul.bf16.gmra.mxu0 %v545
      %v559 = vpop.f32.mrf.mxu0
      %v560 = vadd.f32 0.0, %v559
      %v561 = vpop.f32.mrf.mxu0
      %562 = vdwg.mxu0
      %v563 = vadd.f32 %v524, %v560
      %v564 = vld [vmem:[%s2] sm:$0xff]
      %566 = vset.pattern.permute.xlu0 0
      %567 = vperm.xlu0 %566, %v564
      %v568 = vpop.permute.xlu0 %567
      %v570 = vadd.f32 %v563, %v568
      %v571 = vmax.f32 %v570, 0.0
      %573 = vrot.lane.b32.xlu0 %v571, 112
      %v574 = vpop.permute.xlu0 %573
      %v576 = vmax.f32 %v571, %v574
      %v577 = vld [vmem:[%s4] sm:$0xff]
      %v578 = vld [vmem:[%s4 + $0x8] sm:$0xff]
      %v579 = vld [vmem:[%s4 + $0x10] sm:$0xff]
      %v580 = vld [vmem:[%s4 + $0x18] sm:$0xff]
      %v581 = vld [vmem:[%s4 + $0x20] sm:$0xff]
      %v582 = vld [vmem:[%s4 + $0x28] sm:$0xff]
      %v583 = vld [vmem:[%s4 + $0x30] sm:$0xff]
      %v584 = vld [vmem:[%s4 + $0x38] sm:$0xff]
      %v585 = vld [vmem:[%s4 + $0x40] sm:$0xff]
      %v586 = vld [vmem:[%s4 + $0x48] sm:$0xff]
      %v587 = vld [vmem:[%s4 + $0x50] sm:$0xff]
      %v588 = vld [vmem:[%s4 + $0x58] sm:$0xff]
      %v589 = vld [vmem:[%s4 + $0x60] sm:$0xff]
      %v590 = vld [vmem:[%s4 + $0x68] sm:$0xff]
      %vm591 = vcmask 916480
      %v593 = vsel %vm591, %v576, 0
      %595 = vmatpush.msra.mxu0 0.0
      %596 = vmatpush.msra.mxu0 0.0
      %597 = vmatpush.msra.mxu0 %v590
      %598 = vmatpush.msra.mxu0 %v589
      %599 = vmatpush.msra.mxu0 %v588
      %600 = vmatpush.msra.mxu0 %v587
      %601 = vmatpush.msra.mxu0 %v586
      %602 = vmatpush.msra.mxu0 %v585
      %603 = vmatpush.msra.mxu0 %v584
      %604 = vmatpush.msra.mxu0 %v583
      %605 = vmatpush.msra.mxu0 %v582
      %606 = vmatpush.msra.mxu0 %v581
      %607 = vmatpush.msra.mxu0 %v580
      %608 = vmatpush.msra.mxu0 %v579
      %609 = vmatpush.msra.mxu0 %v578
      %610 = vmatpush.msra.mxu0 %v577
      %611 = vmatmul.f32.gmra.mxu0 %v593
      %v612 = vpop.f32.mrf.mxu0
      %v613 = vadd.f32 0.0, %v612
      %614 = vdwg.mxu0
      %vm615 = vcmask 523264
      %616 = vst.msk [vmem:[%s222] sm:$0xff] %vm615, %v613
      %p617 = scmp.lt.s32.totalorder %s16, 1
      %s618 = scalar_select %p617, %s16, 1
      %s619 = smul.addr %s618, 8
      %s620 = scalar_lea.vmem %s5, %s619
      // Predicated region
      $region41: #{cnn2d_forward.4} parent=39 // pred_check
        %p621 = pneg %p144
      $region42: #{cnn2d_forward.4} parent=39 // pred_check_branch
        %623 = sbr.rel (%p621) target = $region44
      $region43: #{cnn2d_forward.4} parent=39 // pred_region
        _
      $region44: #{cnn2d_forward.4} parent=39 // pred_fallthru
        _
    $region40: #{cnn2d_forward.4} parent=5 // pred_fallthru
      _
    %p624 = scmp.le.s32.totalorder 2, %s11
    // Predicated region
    $region45: #{cnn2d_forward.4} parent=5 // pred_check
      %p625 = pneg %p624
    $region46: #{cnn2d_forward.4} parent=5 // pred_check_branch
      %627 = sbr.rel (%p625) target = $region48
    $region47: #{cnn2d_forward.4} parent=5 // pred_region
      %s628 = ssub.s32 %s11, 2
      // Predicated region
      $region49: #{cnn2d_forward.4} parent=47 // pred_check
        %p629 = pneg %p150
      $region50: #{cnn2d_forward.4} parent=47 // pred_check_branch
        %631 = sbr.rel (%p629) target = $region52
      $region51: #{cnn2d_forward.4} parent=47 // pred_region
        %p632 = scmp.lt.s32.totalorder %s17, 1
        %s633 = scalar_select %p632, %s17, 1
        %s634 = smul.addr %s633, 8
        %s635 = scalar_lea.vmem %s5, %s634
      $region52: #{cnn2d_forward.4} parent=47 // pred_fallthru
        _
    $region48: #{cnn2d_forward.4} parent=5 // pred_fallthru
      _
  $region6: #{cnn2d_forward.4} parent=0 // loop_footer
    %s15 = sadd.s32 1, %s11
  $region7: #{cnn2d_forward.4} parent=0 // loop_footer_branch
    %10 = sbr.rel target = $region3
  $region8: #{cnn2d_forward.4} parent=0 // loop_exit
    _

// kernel: cnn2d_forward.3
$region0: #{cnn2d_forward.3}
  #allocation0 [shape = 'u32[]', space=smem, size = 0x4, offset = 0x4, fixed_abs, tag = 'smem constant byte address 0x4 - core index']
  #allocation1 [shape = 'u32[72,128]{1,0:T(1,128)}', space=vmem, size = 0x9000, scoped, tag = 'internal scratch']
  %s0 = inlined_call_operand.vmem [shape: f32[2,4,290], index: 0, kind: input, shape index: {}]
  %s1 = inlined_call_operand.vmem [shape: bf16[9,8,4], index: 1, kind: input, shape index: {}]
  %s2 = inlined_call_operand.vmem [shape: f32[8,1], index: 2, kind: input, shape index: {}]
  %s3 = inlined_call_operand.vmem [shape: f32[9,256], index: 3, kind: input, shape index: {}]
  %s4 = inlined_call_operand.hbm [shape: f32[240,128], index: 4, kind: input, shape index: {}]
  %s5 = inlined_call_operand.vmem [shape: f32[2,8,128], index: 5, kind: output, shape index: {}]
  %s6 = sld [smem:[#allocation0]]
  $region57: #{cnn2d_forward.3} parent=0
    _
  %s8 = ssub.s32 1, %s6
  %s9 = scalar_select 0, %s8, %s6
  $region1: #{cnn2d_forward.3} parent=0
    #allocation2 [shape = 'u8[122880]{0}', space=vmem, size = 0x1e000, scoped, tag = 'input window, operand 4, single buffered']
    #allocation3 [shape = 's32[2]{0}', space=sflag, size = 0x8, scoped, tag = 'scoped memory for cnn2d_forward.3']
    %10 = vsyncpa [#allocation3], 0
    loop: start=0, step=1, limit=4
    $region2: #{cnn2d_forward.3} parent=1 // loop_pre_header
      _
    $region3: #{cnn2d_forward.3} parent=1 // loop_header
      %s12 = sphi 0, %s16
      %p13 = scmp.ge.s32.totalorder %s12, 4
      %s22 = sphi 0, %s24
      %s25 = sphi 0, %s22
      %s26 = sphi 0, %s25
      %s42 = sphi 0, %s26
      %s46 = sphi 0, %s46
      %s48 = sphi 0, %s46
      %s49 = sphi 0, %s48
      %s63 = sphi 0, %s49
      %s67 = sphi 0, %s67
      %s69 = sphi 0, %s67
      %s70 = sphi 0, %s69
      %s84 = sphi 0, %s70
      %s88 = sphi 0, %s88
      %s90 = sphi 0, %s88
      %s91 = sphi 0, %s90
      %s105 = sphi 0, %s91
      %s109 = sphi 0, %s109
      %s111 = sphi 0, %s109
      %s112 = sphi 0, %s111
      %s126 = sphi 0, %s112
      %s132 = sphi 0, %s134
      %s135 = sphi 0, %s132
      %s136 = sphi 0, %s135
      %s152 = sphi 0, %s136
    $region4: #{cnn2d_forward.3} parent=1 // loop_header_branch
      %15 = sbr.rel (%p13) target = $region8
    $region5: #{cnn2d_forward.3} parent=1 // loop_body
      %s17 = ssub.s32 %s12, 1
      %s18 = ssub.s32 %s12, 2
      %s19 = sadd.s32 %s12, 1
      %s20 = ssub.s32 %s12, %s19
      %p21 = scmp.eq.s32.totalorder %s20, 0
      %s23 = sadd.s32 %s22, 1
      %s24 = scalar_select %p21, %s22, %s23
      %p27 = pneg %p21
      %p28 = scmp.eq.s32.totalorder %s12, 1
      %p29 = por %p27, %p28
      %p30 = scmp.ne.s32.totalorder %s22, %s25
      %p31 = scmp.eq.s32.totalorder %s12, 0
      %p32 = por %p30, %p31
      %p33 = scmp.ne.s32.totalorder %s22, %s25
      %p34 = scmp.eq.s32.totalorder %s17, 1
      %p35 = por %p33, %p34
      %p36 = scmp.ne.s32.totalorder %s25, %s26
      %p37 = scmp.eq.s32.totalorder %s17, 0
      %p38 = por %p36, %p37
      %p39 = scmp.ne.s32.totalorder %s25, %s26
      %p40 = scmp.eq.s32.totalorder %s18, 1
      %p41 = por %p39, %p40
      %p43 = scmp.ne.s32.totalorder %s26, %s42
      %p44 = scmp.eq.s32.totalorder %s18, 0
      %p45 = por %p43, %p44
      %s47 = sadd.s32 %s46, 1
      %p50 = scmp.eq.s32.totalorder %s12, 1
      %p51 = scmp.ne.s32.totalorder %s46, %s48
      %p52 = scmp.eq.s32.totalorder %s12, 0
      %p53 = por %p51, %p52
      %p54 = scmp.ne.s32.totalorder %s46, %s48
      %p55 = scmp.eq.s32.totalorder %s17, 1
      %p56 = por %p54, %p55
      %p57 = scmp.ne.s32.totalorder %s48, %s49
      %p58 = scmp.eq.s32.totalorder %s17, 0
      %p59 = por %p57, %p58
      %p60 = scmp.ne.s32.totalorder %s48, %s49
      %p61 = scmp.eq.s32.totalorder %s18, 1
      %p62 = por %p60, %p61
      %p64 = scmp.ne.s32.totalorder %s49, %s63
      %p65 = scmp.eq.s32.totalorder %s18, 0
      %p66 = por %p64, %p65
      %s68 = sadd.s32 %s67, 1
      %p71 = scmp.eq.s32.totalorder %s12, 1
      %p72 = scmp.ne.s32.totalorder %s67, %s69
      %p73 = scmp.eq.s32.totalorder %s12, 0
      %p74 = por %p72, %p73
      %p75 = scmp.ne.s32.totalorder %s67, %s69
      %p76 = scmp.eq.s32.totalorder %s17, 1
      %p77 = por %p75, %p76
      %p78 = scmp.ne.s32.totalorder %s69, %s70
      %p79 = scmp.eq.s32.totalorder %s17, 0
      %p80 = por %p78, %p79
      %p81 = scmp.ne.s32.totalorder %s69, %s70
      %p82 = scmp.eq.s32.totalorder %s18, 1
      %p83 = por %p81, %p82
      %p85 = scmp.ne.s32.totalorder %s70, %s84
      %p86 = scmp.eq.s32.totalorder %s18, 0
      %p87 = por %p85, %p86
      %s89 = sadd.s32 %s88, 1
      %p92 = scmp.eq.s32.totalorder %s12, 1
      %p93 = scmp.ne.s32.totalorder %s88, %s90
      %p94 = scmp.eq.s32.totalorder %s12, 0
      %p95 = por %p93, %p94
      %p96 = scmp.ne.s32.totalorder %s88, %s90
      %p97 = scmp.eq.s32.totalorder %s17, 1
      %p98 = por %p96, %p97
      %p99 = scmp.ne.s32.totalorder %s90, %s91
      %p100 = scmp.eq.s32.totalorder %s17, 0
      %p101 = por %p99, %p100
      %p102 = scmp.ne.s32.totalorder %s90, %s91
      %p103 = scmp.eq.s32.totalorder %s18, 1
      %p104 = por %p102, %p103
      %p106 = scmp.ne.s32.totalorder %s91, %s105
      %p107 = scmp.eq.s32.totalorder %s18, 0
      %p108 = por %p106, %p107
      %s110 = sadd.s32 %s109, 1
      %p113 = scmp.eq.s32.totalorder %s12, 1
      %p114 = scmp.ne.s32.totalorder %s109, %s111
      %p115 = scmp.eq.s32.totalorder %s12, 0
      %p116 = por %p114, %p115
      %p117 = scmp.ne.s32.totalorder %s109, %s111
      %p118 = scmp.eq.s32.totalorder %s17, 1
      %p119 = por %p117, %p118
      %p120 = scmp.ne.s32.totalorder %s111, %s112
      %p121 = scmp.eq.s32.totalorder %s17, 0
      %p122 = por %p120, %p121
      %p123 = scmp.ne.s32.totalorder %s111, %s112
      %p124 = scmp.eq.s32.totalorder %s18, 1
      %p125 = por %p123, %p124
      %p127 = scmp.ne.s32.totalorder %s112, %s126
      %p128 = scmp.eq.s32.totalorder %s18, 0
      %p129 = por %p127, %p128
      %s130 = ssub.s32 %s12, %s19
      %p131 = scmp.eq.s32.totalorder %s130, 0
      %s133 = sadd.s32 %s132, 1
      %s134 = scalar_select %p131, %s132, %s133
      %p137 = pneg %p131
      %p138 = scmp.eq.s32.totalorder %s12, 1
      %p139 = por %p137, %p138
      %p140 = scmp.ne.s32.totalorder %s132, %s135
      %p141 = scmp.eq.s32.totalorder %s12, 0
      %p142 = por %p140, %p141
      %p143 = scmp.ne.s32.totalorder %s132, %s135
      %p144 = scmp.eq.s32.totalorder %s17, 1
      %p145 = por %p143, %p144
      %p146 = scmp.ne.s32.totalorder %s135, %s136
      %p147 = scmp.eq.s32.totalorder %s17, 0
      %p148 = por %p146, %p147
      %p149 = scmp.ne.s32.totalorder %s135, %s136
      %p150 = scmp.eq.s32.totalorder %s18, 1
      %p151 = por %p149, %p150
      %p153 = scmp.ne.s32.totalorder %s136, %s152
      %p154 = scmp.eq.s32.totalorder %s18, 0
      %p155 = por %p153, %p154
      %p156 = scmp.le.s32.totalorder 1, %s12
      %p157 = scmp.lt.s32.totalorder %s12, 3
      %p158 = pnand %p156, %p157
      %p159 = pneg %p158
      // Predicated region
      $region9: #{cnn2d_forward.3} parent=5 // pred_check
        _
      $region10: #{cnn2d_forward.3} parent=5 // pred_check_branch
        %161 = sbr.rel (%p158) target = $region12
      $region11: #{cnn2d_forward.3} parent=5 // pred_region
        %s162 = ssub.s32 %s12, 1
        // Predicated region
        $region13: #{cnn2d_forward.3} parent=11 // pred_check
          %p163 = pneg %p59
        $region14: #{cnn2d_forward.3} parent=11 // pred_check_branch
          %165 = sbr.rel (%p163) target = $region16
        $region15: #{cnn2d_forward.3} parent=11 // pred_region
          _
        $region16: #{cnn2d_forward.3} parent=11 // pred_fallthru
          _
        // Predicated region
        $region17: #{cnn2d_forward.3} parent=11 // pred_check
          %p166 = pneg %p80
        $region18: #{cnn2d_forward.3} parent=11 // pred_check_branch
          %168 = sbr.rel (%p166) target = $region20
        $region19: #{cnn2d_forward.3} parent=11 // pred_region
          _
        $region20: #{cnn2d_forward.3} parent=11 // pred_fallthru
          _
        // Predicated region
        $region21: #{cnn2d_forward.3} parent=11 // pred_check
          %p169 = pneg %p101
        $region22: #{cnn2d_forward.3} parent=11 // pred_check_branch
          %171 = sbr.rel (%p169) target = $region24
        $region23: #{cnn2d_forward.3} parent=11 // pred_region
          _
        $region24: #{cnn2d_forward.3} parent=11 // pred_fallthru
          _
        // Predicated region
        $region25: #{cnn2d_forward.3} parent=11 // pred_check
          %p172 = pneg %p122
        $region26: #{cnn2d_forward.3} parent=11 // pred_check_branch
          %174 = sbr.rel (%p172) target = $region28
        $region27: #{cnn2d_forward.3} parent=11 // pred_region
          %176 = vsyncadd [#allocation3], 0
          %s177 = sshll.u32 %s4, 4
          %s178 = int_to_ptr.hbm [resolvable:$true] %s177
          %s179 = sshll.u32 [#allocation2], 4
          %s180 = int_to_ptr.vmem [resolvable:$true] %s179
          %185 = dma.hbm_to_vmem [thread:$0]  %s178, 3840, %s180, [#allocation3], 128, 128, 8
        $region28: #{cnn2d_forward.3} parent=11 // pred_fallthru
          _
      $region12: #{cnn2d_forward.3} parent=5 // pred_fallthru
        _
      %p186 = scmp.lt.s32.totalorder %s12, 2
      // Predicated region
      $region29: #{cnn2d_forward.3} parent=5 // pred_check
        %p187 = pneg %p186
      $region30: #{cnn2d_forward.3} parent=5 // pred_check_branch
        %189 = sbr.rel (%p187) target = $region32
      $region31: #{cnn2d_forward.3} parent=5 // pred_region
        // Predicated region
        $region33: #{cnn2d_forward.3} parent=31 // pred_check
          %p190 = pneg %p32
        $region34: #{cnn2d_forward.3} parent=31 // pred_check_branch
          %192 = sbr.rel (%p190) target = $region36
        $region35: #{cnn2d_forward.3} parent=31 // pred_region
          %p193 = scmp.lt.s32.totalorder %s12, 1
          %s194 = scalar_select %p193, %s12, 1
          %s195 = smul.addr %s194, 3
          %s196 = smul.addr %s195, 4
          %s197 = scalar_lea.vmem %s0, %s196
        $region36: #{cnn2d_forward.3} parent=31 // pred_fallthru
          _
      $region32: #{cnn2d_forward.3} parent=5 // pred_fallthru
        _
      %p198 = scmp.le.s32.totalorder 1, %s12
      %p199 = scmp.lt.s32.totalorder %s12, 3
      %p200 = pnand %p198, %p199
      %p201 = pneg %p200
      // Predicated region
      $region37: #{cnn2d_forward.3} parent=5 // pred_check
        _
      $region38: #{cnn2d_forward.3} parent=5 // pred_check_branch
        %203 = sbr.rel (%p200) target = $region40
      $region39: #{cnn2d_forward.3} parent=5 // pred_region
        %s204 = ssub.s32 %s12, 1
        // Predicated region
        $region41: #{cnn2d_forward.3} parent=39 // pred_check
          %p205 = pneg %p122
        $region42: #{cnn2d_forward.3} parent=39 // pred_check_branch
          %207 = sbr.rel (%p205) target = $region44
        $region43: #{cnn2d_forward.3} parent=39 // pred_region
          %209 = dma.done [#allocation3], 3840
        $region44: #{cnn2d_forward.3} parent=39 // pred_fallthru
          _
        %p210 = scmp.lt.s32.totalorder %s17, 1
        %s211 = scalar_select %p210, %s17, 1
        %s212 = smul.addr %s211, 3
        %s213 = smul.addr %s212, 4
        %s214 = scalar_lea.vmem %s0, %s213
        %p215 = pneg %p38
        %p216 = pneg %p35
        %p217 = pneg %p59
        %p218 = pneg %p56
        %p219 = pneg %p80
        %p220 = pneg %p77
        %p221 = pneg %p101
        %p222 = pneg %p98
        %p223 = pneg %p122
        %p224 = pneg %p119
        %p225 = pneg %p148
        %p226 = pneg %p145
        %p227 = scmp.lt.s32.totalorder %s17, 1
        %s228 = scalar_select %p227, %s17, 1
        %s229 = smul.addr %s228, 8
        %s230 = scalar_lea.vmem %s5, %s229
        %p231 = scmp.lt.s32.totalorder %s17, 1
        %s232 = scalar_select %p231, %s17, 1
        %s233 = smul.addr %s232, 3
        %s234 = smul.addr %s233, 4
        %s235 = scalar_lea.vmem %s0, %s234
        %p236 = scmp.lt.s32.totalorder %s17, 1
        %s237 = scalar_select %p236, %s17, 1
        %s238 = smul.addr %s237, 8
        %s239 = scalar_lea.vmem %s5, %s238
        %v241 = vld [vmem:[%s235] sm:$0xff]
        %v242 = vld [vmem:[%s235 + $0x8] sm:$0xf]
        %v243 = vld [vmem:[%s3] sm:$0xff]
        %v244 = vld [vmem:[%s3 + $0x8] sm:$0xff]
        %v245 = vld [vmem:[%s3 + $0x10] sm:$0x1]
        %v246 = vld [vmem:[%s3 + $0x18] sm:$0x1]
        %v247 = vperm.slane %v243, 0
        %v248 = vperm.slane %v244, 0
        %v251 = vrot.slane %v248, 4
        %vm252 = vcmask 1043456
        %v253 = vsel %vm252, %v247, %v251
        %v255 = vmul.f32 %v241, %v253
        %v256 = vld [vmem:[%s1] sm:$0xf]
        %258 = vst [vmem:[#allocation1] ss:$2 sm:$0xff] %v255
        %v259 = vld.sshfl [vmem:[#allocation1] sm:$0xff pattern:$0x75316420]
        %v260 = vld.sshfl [vmem:[#allocation1 + $0x8] sm:$0xff pattern:$0x75316420]
        %v263 = vpack.c.bf16 %v259, %v259
        %v264 = vpack.c.bf16 %v260, %v260
        %v265 = vperm.slane %v243, 1
        %v266 = vperm.slane %v244, 1
        %v269 = vrot.slane %v266, 4
        %v270 = vsel %vm252, %v265, %v269
        %271 = vrot.lane.b32.xlu0 %v270, 1
        %v272 = vpop.permute.xlu0 %271
        %v273 = vrot.slane %v272, 4
        %vm274 = vcmask 7168
        %v275 = vsel %vm274, %v273, %v272
        %v278 = vmul.f32 %v241, %v275
        %v279 = vmul.f32 %v242, %v273
        %s280 = scalar_lea.vmem %s1, 4
        %v281 = vld [vmem:[%s280] sm:$0xf]
        %284 = vst [vmem:[#allocation1] ss:$2 sm:$0xff] %v278
        %s285 = scalar_lea.vmem [#allocation1], 16
        %286 = vst [vmem:[%s285] ss:$2 sm:$0xff] %v279
        %v287 = vld.sshfl [vmem:[#allocation1] sm:$0xff pattern:$0x75316420]
        %v288 = vld.sshfl [vmem:[#allocation1 + $0x8] sm:$0xff pattern:$0x75316420]
        %v289 = vld.sshfl [vmem:[#allocation1 + $0x10] sm:$0xff pattern:$0x75316420]
        %v293 = vpack.c.bf16 %v287, %v287
        %v294 = vpack.c.bf16 %v288, %v288
        %v295 = vpack.c.bf16 %v289, %v289
        %299 = vrot.lane.b32.xlu0 %v293, 127
        %v300 = vpop.permute.xlu0 %299
        %301 = vrot.lane.b32.xlu0 %v294, 127
        %v302 = vpop.permute.xlu0 %301
        %303 = vrot.lane.b32.xlu0 %v295, 127
        %v304 = vpop.permute.xlu0 %303
        %vm305 = vcmask 1039360
        %v306 = vsel %vm305, %v300, %v302
        %v307 = vsel %vm305, %v302, %v304
        %vm308 = vcmask 31744
        %v310 = vsel %vm308, %v281, 0
        %vm312 = vcmask 1041408
        %v314 = vsel %vm312, %v306, 0
        %v317 = vsel %vm312, %v307, 0
        %319 = vmatpush.bf16.msra.mxu0 0
        %320 = vmatpush.bf16.msra.mxu0 0
        %321 = vmatpush.bf16.msra.mxu0 0
        %322 = vmatpush.bf16.msra.mxu0 0
        %323 = vmatpush.bf16.msra.mxu0 0
        %324 = vmatpush.bf16.msra.mxu0 0
        %325 = vmatpush.bf16.msra.mxu0 0
        %326 = vmatpush.bf16.msra.mxu0 %v314
        %327 = vmatmul.bf16.gmra.mxu0 %v310
        %v328 = vpop.f32.mrf.mxu0
        %v329 = vadd.f32 0.0, %v328
        %v330 = vpop.f32.mrf.mxu0
        %331 = vdwg.mxu0
        %332 = vmatpush.bf16.msra.mxu0 0
        %333 = vmatpush.bf16.msra.mxu0 0
        %334 = vmatpush.bf16.msra.mxu0 0
        %335 = vmatpush.bf16.msra.mxu0 0
        %336 = vmatpush.bf16.msra.mxu0 0
        %337 = vmatpush.bf16.msra.mxu0 0
        %338 = vmatpush.bf16.msra.mxu0 0
        %339 = vmatpush.bf16.msra.mxu0 %v317
        %340 = vmatmul.bf16.gmra.mxu0 %v310
        %v341 = vpop.f32.mrf.mxu0
        %v342 = vadd.f32 0.0, %v341
        %v343 = vpop.f32.mrf.mxu0
        %344 = vdwg.mxu0
        %v346 = vsel %vm308, %v256, 0
        %v349 = vsel %vm312, %v263, 0
        %v352 = vsel %vm312, %v264, 0
        %354 = vmatpush.bf16.msra.mxu0 0
        %355 = vmatpush.bf16.msra.mxu0 0
        %356 = vmatpush.bf16.msra.mxu0 0
        %357 = vmatpush.bf16.msra.mxu0 0
        %358 = vmatpush.bf16.msra.mxu0 0
        %359 = vmatpush.bf16.msra.mxu0 0
        %360 = vmatpush.bf16.msra.mxu0 0
        %361 = vmatpush.bf16.msra.mxu0 %v349
        %362 = vmatmul.bf16.gmra.mxu0 %v346
        %v363 = vpop.f32.mrf.mxu0
        %v364 = vadd.f32 %v329, %v363
        %v365 = vpop.f32.mrf.mxu0
        %366 = vdwg.mxu0
        %367 = vmatpush.bf16.msra.mxu0 0
        %368 = vmatpush.bf16.msra.mxu0 0
        %369 = vmatpush.bf16.msra.mxu0 0
        %370 = vmatpush.bf16.msra.mxu0 0
        %371 = vmatpush.bf16.msra.mxu0 0
        %372 = vmatpush.bf16.msra.mxu0 0
        %373 = vmatpush.bf16.msra.mxu0 0
        %374 = vmatpush.bf16.msra.mxu0 %v352
        %375 = vmatmul.bf16.gmra.mxu0 %v346
        %v376 = vpop.f32.mrf.mxu0
        %v377 = vadd.f32 %v342, %v376
        %v378 = vpop.f32.mrf.mxu0
        %379 = vdwg.mxu0
        %v380 = vperm.slane %v243, 2
        %v381 = vperm.slane %v244, 2
        %v384 = vrot.slane %v381, 4
        %v385 = vsel %vm252, %v380, %v384
        %386 = vrot.lane.b32.xlu0 %v385, 2
        %v387 = vpop.permute.xlu0 %386
        %v388 = vrot.slane %v387, 4
        %vm389 = vcmask 15360
        %v390 = vsel %vm389, %v388, %v387
        %v393 = vmul.f32 %v241, %v390
        %v394 = vmul.f32 %v242, %v388
        %s395 = scalar_lea.vmem %s1, 8
        %v396 = vld [vmem:[%s395] sm:$0xf]
        %399 = vst [vmem:[#allocation1] ss:$2 sm:$0xff] %v393
        %s400 = scalar_lea.vmem [#allocation1], 16
        %401 = vst [vmem:[%s400] ss:$2 sm:$0xff] %v394
        %v402 = vld.sshfl [vmem:[#allocation1] sm:$0xff pattern:$0x75316420]
        %v403 = vld.sshfl [vmem:[#allocation1 + $0x8] sm:$0xff pattern:$0x75316420]
        %v404 = vld.sshfl [vmem:[#allocation1 + $0x10] sm:$0xff pattern:$0x75316420]
        %v408 = vpack.c.bf16 %v402, %v402
        %v409 = vpack.c.bf16 %v403, %v403
        %v410 = vpack.c.bf16 %v404, %v404
        %414 = vrot.lane.b32.xlu0 %v408, 126
        %v415 = vpop.permute.xlu0 %414
        %416 = vrot.lane.b32.xlu0 %v409, 126
        %v417 = vpop.permute.xlu0 %416
        %418 = vrot.lane.b32.xlu0 %v410, 126
        %v419 = vpop.permute.xlu0 %418
        %vm420 = vcmask 1031168
        %v421 = vsel %vm420, %v415, %v417
        %v422 = vsel %vm420, %v417, %v419
        %v424 = vsel %vm308, %v396, 0
        %v427 = vsel %vm312, %v421, 0
        %v430 = vsel %vm312, %v422, 0
        %432 = vmatpush.bf16.msra.mxu0 0
        %433 = vmatpush.bf16.msra.mxu0 0
        %434 = vmatpush.bf16.msra.mxu0 0
        %435 = vmatpush.bf16.msra.mxu0 0
        %436 = vmatpush.bf16.msra.mxu0 0
        %437 = vmatpush.bf16.msra.mxu0 0
        %438 = vmatpush.bf16.msra.mxu0 0
        %439 = vmatpush.bf16.msra.mxu0 %v427
        %440 = vmatmul.bf16.gmra.mxu0 %v424
        %v441 = vpop.f32.mrf.mxu0
        %v442 = vadd.f32 0.0, %v441
        %v443 = vpop.f32.mrf.mxu0
        %444 = vdwg.mxu0
        %445 = vmatpush.bf16.msra.mxu0 0
        %446 = vmatpush.bf16.msra.mxu0 0
        %447 = vmatpush.bf16.msra.mxu0 0
        %448 = vmatpush.bf16.msra.mxu0 0
        %449 = vmatpush.bf16.msra.mxu0 0
        %450 = vmatpush.bf16.msra.mxu0 0
        %451 = vmatpush.bf16.msra.mxu0 0
        %452 = vmatpush.bf16.msra.mxu0 %v430
        %453 = vmatmul.bf16.gmra.mxu0 %v424
        %v454 = vpop.f32.mrf.mxu0
        %v455 = vadd.f32 0.0, %v454
        %v456 = vpop.f32.mrf.mxu0
        %457 = vdwg.mxu0
        %v458 = vadd.f32 %v364, %v442
        %v459 = vadd.f32 %v377, %v455
        %v460 = vperm.slane %v243, 3
        %v461 = vperm.slane %v244, 3
        %v464 = vrot.slane %v461, 4
        %v465 = vsel %vm252, %v460, %v464
        %466 = vrot.lane.b32.xlu0 %v465, 16
        %v467 = vpop.permute.xlu0 %466
        %v468 = vrot.slane %v467, 4
        %vm469 = vcmask 130048
        %v470 = vsel %vm469, %v468, %v467
        %v473 = vmul.f32 %v241, %v470
        %v474 = vmul.f32 %v242, %v468
        %s475 = scalar_lea.vmem %s1, 12
        %v476 = vld [vmem:[%s475] sm:$0xf]
        %479 = vst [vmem:[#allocation1] ss:$2 sm:$0xff] %v473
        %s480 = scalar_lea.vmem [#allocation1], 16
        %481 = vst [vmem:[%s480] ss:$2 sm:$0xff] %v474
        %v482 = vld.sshfl [vmem:[#allocation1] sm:$0xff pattern:$0x75316420]
        %v483 = vld.sshfl [vmem:[#allocation1 + $0x8] sm:$0xff pattern:$0x75316420]
        %v484 = vld.sshfl [vmem:[#allocation1 + $0x10] sm:$0xff pattern:$0x75316420]
        %v488 = vpack.c.bf16 %v482, %v482
        %v489 = vpack.c.bf16 %v483, %v483
        %v490 = vpack.c.bf16 %v484, %v484
        %494 = vrot.lane.b32.xlu0 %v488, 112
        %v495 = vpop.permute.xlu0 %494
        %496 = vrot.lane.b32.xlu0 %v489, 112
        %v497 = vpop.permute.xlu0 %496
        %498 = vrot.lane.b32.xlu0 %v490, 112
        %v499 = vpop.permute.xlu0 %498
        %vm500 = vcmask 916480
        %v501 = vsel %vm500, %v495, %v497
        %v502 = vsel %vm500, %v497, %v499
        %v504 = vsel %vm308, %v476, 0
        %v507 = vsel %vm312, %v501, 0
        %v510 = vsel %vm312, %v502, 0
        %512 = vmatpush.bf16.msra.mxu0 0
        %513 = vmatpush.bf16.msra.mxu0 0
        %514 = vmatpush.bf16.msra.mxu0 0
        %515 = vmatpush.bf16.msra.mxu0 0
        %516 = vmatpush.bf16.msra.mxu0 0
        %517 = vmatpush.bf16.msra.mxu0 0
        %518 = vmatpush.bf16.msra.mxu0 0
        %519 = vmatpush.bf16.msra.mxu0 %v507
        %520 = vmatmul.bf16.gmra.mxu0 %v504
        %v521 = vpop.f32.mrf.mxu0
        %v522 = vadd.f32 0.0, %v521
        %v523 = vpop.f32.mrf.mxu0
        %524 = vdwg.mxu0
        %525 = vmatpush.bf16.msra.mxu0 0
        %526 = vmatpush.bf16.msra.mxu0 0
        %527 = vmatpush.bf16.msra.mxu0 0
        %528 = vmatpush.bf16.msra.mxu0 0
        %529 = vmatpush.bf16.msra.mxu0 0
        %530 = vmatpush.bf16.msra.mxu0 0
        %531 = vmatpush.bf16.msra.mxu0 0
        %532 = vmatpush.bf16.msra.mxu0 %v510
        %533 = vmatmul.bf16.gmra.mxu0 %v504
        %v534 = vpop.f32.mrf.mxu0
        %v535 = vadd.f32 0.0, %v534
        %v536 = vpop.f32.mrf.mxu0
        %537 = vdwg.mxu0
        %v538 = vadd.f32 %v458, %v522
        %v539 = vadd.f32 %v459, %v535
        %v540 = vperm.slane %v243, 4
        %v541 = vperm.slane %v244, 4
        %v544 = vrot.slane %v541, 4
        %v545 = vsel %vm252, %v540, %v544
        %546 = vrot.lane.b32.xlu0 %v545, 17
        %v547 = vpop.permute.xlu0 %546
        %v548 = vrot.slane %v547, 4
        %vm549 = vcmask 138240
        %v550 = vsel %vm549, %v548, %v547
        %v553 = vmul.f32 %v241, %v550
        %v554 = vmul.f32 %v242, %v548
        %s555 = scalar_lea.vmem %s1, 16
        %v556 = vld [vmem:[%s555] sm:$0xf]
        %559 = vst [vmem:[#allocation1] ss:$2 sm:$0xff] %v553
        %s560 = scalar_lea.vmem [#allocation1], 16
        %561 = vst [vmem:[%s560] ss:$2 sm:$0xff] %v554
        %v562 = vld.sshfl [vmem:[#allocation1] sm:$0xff pattern:$0x75316420]
        %v563 = vld.sshfl [vmem:[#allocation1 + $0x8] sm:$0xff pattern:$0x75316420]
        %v564 = vld.sshfl [vmem:[#allocation1 + $0x10] sm:$0xff pattern:$0x75316420]
        %v568 = vpack.c.bf16 %v562, %v562
        %v569 = vpack.c.bf16 %v563, %v563
        %v570 = vpack.c.bf16 %v564, %v564
        %574 = vrot.lane.b32.xlu0 %v568, 111
        %v575 = vpop.permute.xlu0 %574
        %576 = vrot.lane.b32.xlu0 %v569, 111
        %v577 = vpop.permute.xlu0 %576
        %578 = vrot.lane.b32.xlu0 %v570, 111
        %v579 = vpop.permute.xlu0 %578
        %vm580 = vcmask 908288
        %v581 = vsel %vm580, %v575, %v577
        %v582 = vsel %vm580, %v577, %v579
        %v584 = vsel %vm308, %v556, 0
        %v587 = vsel %vm312, %v581, 0
        %v590 = vsel %vm312, %v582, 0
        %592 = vmatpush.bf16.msra.mxu0 0
        %593 = vmatpush.bf16.msra.mxu0 0
        %594 = vmatpush.bf16.msra.mxu0 0
        %595 = vmatpush.bf16.msra.mxu0 0
        %596 = vmatpush.bf16.msra.mxu0 0
        %597 = vmatpush.bf16.msra.mxu0 0
        %598 = vmatpush.bf16.msra.mxu0 0
        %599 = vmatpush.bf16.msra.mxu0 %v587
        %600 = vmatmul.bf16.gmra.mxu0 %v584
        %v601 = vpop.f32.mrf.mxu0
        %v602 = vadd.f32 0.0, %v601
        %v603 = vpop.f32.mrf.mxu0
        %604 = vdwg.mxu0
        %605 = vmatpush.bf16.msra.mxu0 0
        %606 = vmatpush.bf16.msra.mxu0 0
        %607 = vmatpush.bf16.msra.mxu0 0
        %608 = vmatpush.bf16.msra.mxu0 0
        %609 = vmatpush.bf16.msra.mxu0 0
        %610 = vmatpush.bf16.msra.mxu0 0
        %611 = vmatpush.bf16.msra.mxu0 0
        %612 = vmatpush.bf16.msra.mxu0 %v590
        %613 = vmatmul.bf16.gmra.mxu0 %v584
        %v614 = vpop.f32.mrf.mxu0
        %v615 = vadd.f32 0.0, %v614
        %v616 = vpop.f32.mrf.mxu0
        %617 = vdwg.mxu0
        %v618 = vadd.f32 %v538, %v602
        %v619 = vadd.f32 %v539, %v615
        %v620 = vperm.slane %v243, 5
        %v621 = vperm.slane %v244, 5
        %v624 = vrot.slane %v621, 4
        %v625 = vsel %vm252, %v620, %v624
        %626 = vrot.lane.b32.xlu0 %v625, 18
        %v627 = vpop.permute.xlu0 %626
        %v628 = vrot.slane %v627, 4
        %vm629 = vcmask 146432
        %v630 = vsel %vm629, %v628, %v627
        %v633 = vmul.f32 %v241, %v630
        %v634 = vmul.f32 %v242, %v628
        %s635 = scalar_lea.vmem %s1, 20
        %v636 = vld [vmem:[%s635] sm:$0xf]
        %639 = vst [vmem:[#allocation1] ss:$2 sm:$0xff] %v633
        %s640 = scalar_lea.vmem [#allocation1], 16
        %641 = vst [vmem:[%s640] ss:$2 sm:$0xff] %v634
        %v642 = vld.sshfl [vmem:[#allocation1] sm:$0xff pattern:$0x75316420]
        %v643 = vld.sshfl [vmem:[#allocation1 + $0x8] sm:$0xff pattern:$0x75316420]
        %v644 = vld.sshfl [vmem:[#allocation1 + $0x10] sm:$0xff pattern:$0x75316420]
        %v648 = vpack.c.bf16 %v642, %v642
        %v649 = vpack.c.bf16 %v643, %v643
        %v650 = vpack.c.bf16 %v644, %v644
        %654 = vrot.lane.b32.xlu0 %v648, 110
        %v655 = vpop.permute.xlu0 %654
        %656 = vrot.lane.b32.xlu0 %v649, 110
        %v657 = vpop.permute.xlu0 %656
        %658 = vrot.lane.b32.xlu0 %v650, 110
        %v659 = vpop.permute.xlu0 %658
        %vm660 = vcmask 900096
        %v661 = vsel %vm660, %v655, %v657
        %v662 = vsel %vm660, %v657, %v659
        %v664 = vsel %vm308, %v636, 0
        %v667 = vsel %vm312, %v661, 0
        %v670 = vsel %vm312, %v662, 0
        %672 = vmatpush.bf16.msra.mxu0 0
        %673 = vmatpush.bf16.msra.mxu0 0
        %674 = vmatpush.bf16.msra.mxu0 0
        %675 = vmatpush.bf16.msra.mxu0 0
        %676 = vmatpush.bf16.msra.mxu0 0
        %677 = vmatpush.bf16.msra.mxu0 0
        %678 = vmatpush.bf16.msra.mxu0 0
        %679 = vmatpush.bf16.msra.mxu0 %v667
        %680 = vmatmul.bf16.gmra.mxu0 %v664
        %v681 = vpop.f32.mrf.mxu0
        %v682 = vadd.f32 0.0, %v681
        %v683 = vpop.f32.mrf.mxu0
        %684 = vdwg.mxu0
        %685 = vmatpush.bf16.msra.mxu0 0
        %686 = vmatpush.bf16.msra.mxu0 0
        %687 = vmatpush.bf16.msra.mxu0 0
        %688 = vmatpush.bf16.msra.mxu0 0
        %689 = vmatpush.bf16.msra.mxu0 0
        %690 = vmatpush.bf16.msra.mxu0 0
        %691 = vmatpush.bf16.msra.mxu0 0
        %692 = vmatpush.bf16.msra.mxu0 %v670
        %693 = vmatmul.bf16.gmra.mxu0 %v664
        %v694 = vpop.f32.mrf.mxu0
        %v695 = vadd.f32 0.0, %v694
        %v696 = vpop.f32.mrf.mxu0
        %697 = vdwg.mxu0
        %v698 = vadd.f32 %v618, %v682
        %v699 = vadd.f32 %v619, %v695
        %v700 = vperm.slane %v243, 6
        %v701 = vperm.slane %v244, 6
        %v704 = vrot.slane %v701, 4
        %v705 = vsel %vm252, %v700, %v704
        %706 = vrot.lane.b32.xlu0 %v705, 32
        %v707 = vpop.permute.xlu0 %706
        %v708 = vrot.slane %v707, 4
        %vm709 = vcmask 261120
        %v710 = vsel %vm709, %v708, %v707
        %v713 = vmul.f32 %v241, %v710
        %v714 = vmul.f32 %v242, %v708
        %s715 = scalar_lea.vmem %s1, 24
        %v716 = vld [vmem:[%s715] sm:$0xf]
        %719 = vst [vmem:[#allocation1] ss:$2 sm:$0xff] %v713
        %s720 = scalar_lea.vmem [#allocation1], 16
        %721 = vst [vmem:[%s720] ss:$2 sm:$0xff] %v714
        %v722 = vld.sshfl [vmem:[#allocation1] sm:$0xff pattern:$0x75316420]
        %v723 = vld.sshfl [vmem:[#allocation1 + $0x8] sm:$0xff pattern:$0x75316420]
        %v724 = vld.sshfl [vmem:[#allocation1 + $0x10] sm:$0xff pattern:$0x75316420]
        %v728 = vpack.c.bf16 %v722, %v722
        %v729 = vpack.c.bf16 %v723, %v723
        %v730 = vpack.c.bf16 %v724, %v724
        %734 = vrot.lane.b32.xlu0 %v728, 96
        %v735 = vpop.permute.xlu0 %734
        %736 = vrot.lane.b32.xlu0 %v729, 96
        %v737 = vpop.permute.xlu0 %736
        %738 = vrot.lane.b32.xlu0 %v730, 96
        %v739 = vpop.permute.xlu0 %738
        %vm740 = vcmask 785408
        %v741 = vsel %vm740, %v735, %v737
        %v742 = vsel %vm740, %v737, %v739
        %v744 = vsel %vm308, %v716, 0
        %v747 = vsel %vm312, %v741, 0
        %v750 = vsel %vm312, %v742, 0
        %752 = vmatpush.bf16.msra.mxu0 0
        %753 = vmatpush.bf16.msra.mxu0 0
        %754 = vmatpush.bf16.msra.mxu0 0
        %755 = vmatpush.bf16.msra.mxu0 0
        %756 = vmatpush.bf16.msra.mxu0 0
        %757 = vmatpush.bf16.msra.mxu0 0
        %758 = vmatpush.bf16.msra.mxu0 0
        %759 = vmatpush.bf16.msra.mxu0 %v747
        %760 = vmatmul.bf16.gmra.mxu0 %v744
        %v761 = vpop.f32.mrf.mxu0
        %v762 = vadd.f32 0.0, %v761
        %v763 = vpop.f32.mrf.mxu0
        %764 = vdwg.mxu0
        %765 = vmatpush.bf16.msra.mxu0 0
        %766 = vmatpush.bf16.msra.mxu0 0
        %767 = vmatpush.bf16.msra.mxu0 0
        %768 = vmatpush.bf16.msra.mxu0 0
        %769 = vmatpush.bf16.msra.mxu0 0
        %770 = vmatpush.bf16.msra.mxu0 0
        %771 = vmatpush.bf16.msra.mxu0 0
        %772 = vmatpush.bf16.msra.mxu0 %v750
        %773 = vmatmul.bf16.gmra.mxu0 %v744
        %v774 = vpop.f32.mrf.mxu0
        %v775 = vadd.f32 0.0, %v774
        %v776 = vpop.f32.mrf.mxu0
        %777 = vdwg.mxu0
        %v778 = vadd.f32 %v698, %v762
        %v779 = vadd.f32 %v699, %v775
        %v780 = vperm.slane %v243, 7
        %v781 = vperm.slane %v244, 7
        %v784 = vrot.slane %v781, 4
        %v785 = vsel %vm252, %v780, %v784
        %786 = vrot.lane.b32.xlu0 %v785, 33
        %v787 = vpop.permute.xlu0 %786
        %v788 = vrot.slane %v787, 4
        %vm789 = vcmask 269312
        %v790 = vsel %vm789, %v788, %v787
        %v793 = vmul.f32 %v241, %v790
        %v794 = vmul.f32 %v242, %v788
        %s795 = scalar_lea.vmem %s1, 28
        %v796 = vld [vmem:[%s795] sm:$0xf]
        %799 = vst [vmem:[#allocation1] ss:$2 sm:$0xff] %v793
        %s800 = scalar_lea.vmem [#allocation1], 16
        %801 = vst [vmem:[%s800] ss:$2 sm:$0xff] %v794
        %v802 = vld.sshfl [vmem:[#allocation1] sm:$0xff pattern:$0x75316420]
        %v803 = vld.sshfl [vmem:[#allocation1 + $0x8] sm:$0xff pattern:$0x75316420]
        %v804 = vld.sshfl [vmem:[#allocation1 + $0x10] sm:$0xff pattern:$0x75316420]
        %v808 = vpack.c.bf16 %v802, %v802
        %v809 = vpack.c.bf16 %v803, %v803
        %v810 = vpack.c.bf16 %v804, %v804
        %814 = vrot.lane.b32.xlu0 %v808, 95
        %v815 = vpop.permute.xlu0 %814
        %816 = vrot.lane.b32.xlu0 %v809, 95
        %v817 = vpop.permute.xlu0 %816
        %818 = vrot.lane.b32.xlu0 %v810, 95
        %v819 = vpop.permute.xlu0 %818
        %vm820 = vcmask 777216
        %v821 = vsel %vm820, %v815, %v817
        %v822 = vsel %vm820, %v817, %v819
        %v824 = vsel %vm308, %v796, 0
        %v827 = vsel %vm312, %v821, 0
        %v830 = vsel %vm312, %v822, 0
        %832 = vmatpush.bf16.msra.mxu0 0
        %833 = vmatpush.bf16.msra.mxu0 0
        %834 = vmatpush.bf16.msra.mxu0 0
        %835 = vmatpush.bf16.msra.mxu0 0
        %836 = vmatpush.bf16.msra.mxu0 0
        %837 = vmatpush.bf16.msra.mxu0 0
        %838 = vmatpush.bf16.msra.mxu0 0
        %839 = vmatpush.bf16.msra.mxu0 %v827
        %840 = vmatmul.bf16.gmra.mxu0 %v824
        %v841 = vpop.f32.mrf.mxu0
        %v842 = vadd.f32 0.0, %v841
        %v843 = vpop.f32.mrf.mxu0
        %844 = vdwg.mxu0
        %845 = vmatpush.bf16.msra.mxu0 0
        %846 = vmatpush.bf16.msra.mxu0 0
        %847 = vmatpush.bf16.msra.mxu0 0
        %848 = vmatpush.bf16.msra.mxu0 0
        %849 = vmatpush.bf16.msra.mxu0 0
        %850 = vmatpush.bf16.msra.mxu0 0
        %851 = vmatpush.bf16.msra.mxu0 0
        %852 = vmatpush.bf16.msra.mxu0 %v830
        %853 = vmatmul.bf16.gmra.mxu0 %v824
        %v854 = vpop.f32.mrf.mxu0
        %v855 = vadd.f32 0.0, %v854
        %v856 = vpop.f32.mrf.mxu0
        %857 = vdwg.mxu0
        %v858 = vadd.f32 %v778, %v842
        %v859 = vadd.f32 %v779, %v855
        %v860 = vperm.slane %v245, 0
        %v861 = vperm.slane %v246, 0
        %v864 = vrot.slane %v861, 4
        %v865 = vsel %vm252, %v860, %v864
        %866 = vrot.lane.b32.xlu0 %v865, 34
        %v867 = vpop.permute.xlu0 %866
        %v868 = vrot.slane %v867, 4
        %vm869 = vcmask 277504
        %v870 = vsel %vm869, %v868, %v867
        %v873 = vmul.f32 %v241, %v870
        %v874 = vmul.f32 %v242, %v868
        %s875 = scalar_lea.vmem %s1, 32
        %v876 = vld [vmem:[%s875] sm:$0xf]
        %879 = vst [vmem:[#allocation1] ss:$2 sm:$0xff] %v873
        %s880 = scalar_lea.vmem [#allocation1], 16
        %881 = vst [vmem:[%s880] ss:$2 sm:$0xff] %v874
        %v882 = vld.sshfl [vmem:[#allocation1] sm:$0xff pattern:$0x75316420]
        %v883 = vld.sshfl [vmem:[#allocation1 + $0x8] sm:$0xff pattern:$0x75316420]
        %v884 = vld.sshfl [vmem:[#allocation1 + $0x10] sm:$0xff pattern:$0x75316420]
        %v888 = vpack.c.bf16 %v882, %v882
        %v889 = vpack.c.bf16 %v883, %v883
        %v890 = vpack.c.bf16 %v884, %v884
        %894 = vrot.lane.b32.xlu0 %v888, 94
        %v895 = vpop.permute.xlu0 %894
        %896 = vrot.lane.b32.xlu0 %v889, 94
        %v897 = vpop.permute.xlu0 %896
        %898 = vrot.lane.b32.xlu0 %v890, 94
        %v899 = vpop.permute.xlu0 %898
        %vm900 = vcmask 769024
        %v901 = vsel %vm900, %v895, %v897
        %v902 = vsel %vm900, %v897, %v899
        %v904 = vsel %vm308, %v876, 0
        %v907 = vsel %vm312, %v901, 0
        %v910 = vsel %vm312, %v902, 0
        %912 = vmatpush.bf16.msra.mxu0 0
        %913 = vmatpush.bf16.msra.mxu0 0
        %914 = vmatpush.bf16.msra.mxu0 0
        %915 = vmatpush.bf16.msra.mxu0 0
        %916 = vmatpush.bf16.msra.mxu0 0
        %917 = vmatpush.bf16.msra.mxu0 0
        %918 = vmatpush.bf16.msra.mxu0 0
        %919 = vmatpush.bf16.msra.mxu0 %v907
        %920 = vmatmul.bf16.gmra.mxu0 %v904
        %v921 = vpop.f32.mrf.mxu0
        %v922 = vadd.f32 0.0, %v921
        %v923 = vpop.f32.mrf.mxu0
        %924 = vdwg.mxu0
        %925 = vmatpush.bf16.msra.mxu0 0
        %926 = vmatpush.bf16.msra.mxu0 0
        %927 = vmatpush.bf16.msra.mxu0 0
        %928 = vmatpush.bf16.msra.mxu0 0
        %929 = vmatpush.bf16.msra.mxu0 0
        %930 = vmatpush.bf16.msra.mxu0 0
        %931 = vmatpush.bf16.msra.mxu0 0
        %932 = vmatpush.bf16.msra.mxu0 %v910
        %933 = vmatmul.bf16.gmra.mxu0 %v904
        %v934 = vpop.f32.mrf.mxu0
        %v935 = vadd.f32 0.0, %v934
        %v936 = vpop.f32.mrf.mxu0
        %937 = vdwg.mxu0
        %v938 = vadd.f32 %v858, %v922
        %v939 = vadd.f32 %v859, %v935
        %v940 = vld [vmem:[%s2] sm:$0xff]
        %942 = vset.pattern.permute.xlu0 0
        %943 = vperm.xlu0 %942, %v940
        %v944 = vpop.permute.xlu0 %943
        %v946 = vadd.f32 %v938, %v944
        %v947 = vadd.f32 %v939, %v944
        %v948 = vmax.f32 %v946, 0.0
        %v949 = vmax.f32 %v947, 0.0
        %952 = vrot.lane.b32.xlu0 %v948, 112
        %v953 = vpop.permute.xlu0 %952
        %954 = vrot.lane.b32.xlu0 %v949, 112
        %v955 = vpop.permute.xlu0 %954
        %vm956 = vcmask 916480
        %v957 = vsel %vm956, %v953, %v955
        %v960 = vmax.f32 %v948, %v957
        %v961 = vmax.f32 %v949, %v955
        %v962 = vld [vmem:[#allocation2] sm:$0xff]
        %v963 = vld [vmem:[#allocation2 + $0x8] sm:$0xff]
        %v964 = vld [vmem:[#allocation2 + $0x10] sm:$0xff]
        %v965 = vld [vmem:[#allocation2 + $0x18] sm:$0xff]
        %v966 = vld [vmem:[#allocation2 + $0x20] sm:$0xff]
        %v967 = vld [vmem:[#allocation2 + $0x28] sm:$0xff]
        %v968 = vld [vmem:[#allocation2 + $0x30] sm:$0xff]
        %v969 = vld [vmem:[#allocation2 + $0x38] sm:$0xff]
        %v970 = vld [vmem:[#allocation2 + $0x40] sm:$0xff]
        %v971 = vld [vmem:[#allocation2 + $0x48] sm:$0xff]
        %v972 = vld [vmem:[#allocation2 + $0x50] sm:$0xff]
        %v973 = vld [vmem:[#allocation2 + $0x58] sm:$0xff]
        %v974 = vld [vmem:[#allocation2 + $0x60] sm:$0xff]
        %v975 = vld [vmem:[#allocation2 + $0x68] sm:$0xff]
        %v976 = vld [vmem:[#allocation2 + $0x70] sm:$0xff]
        %v977 = vld [vmem:[#allocation2 + $0x78] sm:$0xff]
        %v978 = vld [vmem:[#allocation2 + $0x80] sm:$0xff]
        %v979 = vld [vmem:[#allocation2 + $0x88] sm:$0xff]
        %v980 = vld [vmem:[#allocation2 + $0x90] sm:$0xff]
        %v981 = vld [vmem:[#allocation2 + $0x98] sm:$0xff]
        %v982 = vld [vmem:[#allocation2 + $0xa0] sm:$0xff]
        %v983 = vld [vmem:[#allocation2 + $0xa8] sm:$0xff]
        %v984 = vld [vmem:[#allocation2 + $0xb0] sm:$0xff]
        %v985 = vld [vmem:[#allocation2 + $0xb8] sm:$0xff]
        %v986 = vld [vmem:[#allocation2 + $0xc0] sm:$0xff]
        %v987 = vld [vmem:[#allocation2 + $0xc8] sm:$0xff]
        %v988 = vld [vmem:[#allocation2 + $0xd0] sm:$0xff]
        %v989 = vld [vmem:[#allocation2 + $0xd8] sm:$0xff]
        %v990 = vld [vmem:[#allocation2 + $0xe0] sm:$0xff]
        %v991 = vld [vmem:[#allocation2 + $0xe8] sm:$0xff]
        %v993 = vsel %vm956, %v961, 0
        %995 = vmatpush.msra.mxu0 %v977
        %996 = vmatpush.msra.mxu0 %v976
        %997 = vmatpush.msra.mxu0 %v975
        %998 = vmatpush.msra.mxu0 %v974
        %999 = vmatpush.msra.mxu0 %v973
        %1000 = vmatpush.msra.mxu0 %v972
        %1001 = vmatpush.msra.mxu0 %v971
        %1002 = vmatpush.msra.mxu0 %v970
        %1003 = vmatpush.msra.mxu0 %v969
        %1004 = vmatpush.msra.mxu0 %v968
        %1005 = vmatpush.msra.mxu0 %v967
        %1006 = vmatpush.msra.mxu0 %v966
        %1007 = vmatpush.msra.mxu0 %v965
        %1008 = vmatpush.msra.mxu0 %v964
        %1009 = vmatpush.msra.mxu0 %v963
        %1010 = vmatpush.msra.mxu0 %v962
        %1011 = vmatmul.f32.gmra.mxu0 %v960
        %v1012 = vpop.f32.mrf.mxu0
        %v1013 = vadd.f32 0.0, %v1012
        %1014 = vdwg.mxu0
        %1015 = vmatpush.msra.mxu0 0.0
        %1016 = vmatpush.msra.mxu0 0.0
        %1017 = vmatpush.msra.mxu0 %v991
        %1018 = vmatpush.msra.mxu0 %v990
        %1019 = vmatpush.msra.mxu0 %v989
        %1020 = vmatpush.msra.mxu0 %v988
        %1021 = vmatpush.msra.mxu0 %v987
        %1022 = vmatpush.msra.mxu0 %v986
        %1023 = vmatpush.msra.mxu0 %v985
        %1024 = vmatpush.msra.mxu0 %v984
        %1025 = vmatpush.msra.mxu0 %v983
        %1026 = vmatpush.msra.mxu0 %v982
        %1027 = vmatpush.msra.mxu0 %v981
        %1028 = vmatpush.msra.mxu0 %v980
        %1029 = vmatpush.msra.mxu0 %v979
        %1030 = vmatpush.msra.mxu0 %v978
        %1031 = vmatmul.f32.gmra.mxu0 %v993
        %v1032 = vpop.f32.mrf.mxu0
        %v1033 = vadd.f32 %v1013, %v1032
        %1034 = vdwg.mxu0
        %1035 = vst [vmem:[%s239] sm:$0xff] %v1033
        %p1036 = scmp.lt.s32.totalorder %s17, 1
        %s1037 = scalar_select %p1036, %s17, 1
        %s1038 = smul.addr %s1037, 8
        %s1039 = scalar_lea.vmem %s5, %s1038
        // Predicated region
        $region45: #{cnn2d_forward.3} parent=39 // pred_check
          %p1040 = pneg %p145
        $region46: #{cnn2d_forward.3} parent=39 // pred_check_branch
          %1042 = sbr.rel (%p1040) target = $region48
        $region47: #{cnn2d_forward.3} parent=39 // pred_region
          _
        $region48: #{cnn2d_forward.3} parent=39 // pred_fallthru
          _
      $region40: #{cnn2d_forward.3} parent=5 // pred_fallthru
        _
      %p1043 = scmp.le.s32.totalorder 2, %s12
      // Predicated region
      $region49: #{cnn2d_forward.3} parent=5 // pred_check
        %p1044 = pneg %p1043
      $region50: #{cnn2d_forward.3} parent=5 // pred_check_branch
        %1046 = sbr.rel (%p1044) target = $region52
      $region51: #{cnn2d_forward.3} parent=5 // pred_region
        %s1047 = ssub.s32 %s12, 2
        // Predicated region
        $region53: #{cnn2d_forward.3} parent=51 // pred_check
          %p1048 = pneg %p151
        $region54: #{cnn2d_forward.3} parent=51 // pred_check_branch
          %1050 = sbr.rel (%p1048) target = $region56
        $region55: #{cnn2d_forward.3} parent=51 // pred_region
          %p1051 = scmp.lt.s32.totalorder %s18, 1
          %s1052 = scalar_select %p1051, %s18, 1
          %s1053 = smul.addr %s1052, 8
          %s1054 = scalar_lea.vmem %s5, %s1053
        $region56: #{cnn2d_forward.3} parent=51 // pred_fallthru
          _
      $region52: #{cnn2d_forward.3} parent=5 // pred_fallthru
        _
    $region6: #{cnn2d_forward.3} parent=1 // loop_footer
      %s16 = sadd.s32 1, %s12
    $region7: #{cnn2d_forward.3} parent=1 // loop_footer_branch
      %11 = sbr.rel target = $region3
    $region8: #{cnn2d_forward.3} parent=1 // loop_exit
      _
    %1055 = vsyncpa [#allocation3], 1
    %s1056 = scalar_lea.sflag [#allocation3], 1
    %1057 = vsyncpa %s1056, 1

</llo_original>
